<compile_context>
chip_gen: v7x
topology: tpu7x:2x2x1
jax: 0.10.0
libtpu: 0.0.40
codegen_flags: <defaults>
</compile_context>

<pallas_src>
import functools

import jax
import jax.numpy as jnp
from jax.experimental import pallas as pl
from jax.experimental.pallas import tpu as pltpu


def _round_up(v, m):
    return (v + m - 1) // m * m


def _new_branch_kernel(x_ref, w1_ref, b1_ref, w2_ref, b2_ref,
                       feat_ref, logits_ref, acc_ref,
                       *, use_max_pool, inv_hw):
    """Grid = (batch tiles, spatial-reduction tiles); reduction axis is last.

    x_ref:      (TN, TS, C)  current batch/spatial tile (input dtype)
    w1_ref:     (C, Dp)      BN-folded fc weight   (resident, f32)
    b1_ref:     (1, Dp)      BN-folded fc bias     (resident, f32)
    w2_ref:     (Dp, Kp)     classifier weight     (resident, f32)
    b2_ref:     (1, Kp)      classifier bias       (resident, f32)
    feat_ref:   (TN, Dp)     output (written at last reduction step)
    logits_ref: (TN, Kp)     output (written at last reduction step)
    acc_ref:    (TN, C)      f32 pooling accumulator scratch
    """
    r = pl.program_id(1)

    @pl.when(r == 0)
    def _init():
        if use_max_pool:
            acc_ref[...] = jnp.full_like(acc_ref, -jnp.inf)
        else:
            acc_ref[...] = jnp.zeros_like(acc_ref)

    # Pool over the spatial (second-minor) axis; C stays on lanes.
    x = x_ref[...].astype(jnp.float32)            # (TN, TS, C)
    if use_max_pool:
        acc_ref[...] = jnp.maximum(acc_ref[...], jnp.max(x, axis=1))
    else:
        acc_ref[...] = acc_ref[...] + jnp.sum(x, axis=1)

    @pl.when(r == pl.num_programs(1) - 1)
    def _finalize():
        pooled = acc_ref[...]                     # (TN, C)
        if not use_max_pool:
            pooled = pooled * inv_hw              # single multiply at finalize

        # fc: Linear (BatchNorm folded into w1/b1) + ReLU
        y = jnp.dot(pooled, w1_ref[...], preferred_element_type=jnp.float32)
        y = jnp.maximum(y + b1_ref[...], 0.0)
        feat_ref[...] = y.astype(feat_ref.dtype)

        # classifier: Linear(global_dim -> num_classes)
        logits = jnp.dot(y, w2_ref[...], preferred_element_type=jnp.float32)
        logits_ref[...] = (logits + b2_ref[...]).astype(logits_ref.dtype)


def new_branch_forward(x, params, *, use_max_pool=False, eps=1e-5):
    """x: (N, C, H, W). Returns (predict, xent, triplet, {}, features_map)."""
    N, C, H, W = x.shape
    HW = H * W
    dtype = x.dtype
    itemsize = jnp.dtype(dtype).itemsize

    # ---- Fold BatchNorm1d (inference running stats) into the fc Linear -----
    scale = params["gamma"] * jax.lax.rsqrt(params["var"] + eps)        # (1, D)
    w1f = params["w1"].astype(jnp.float32) * scale                      # (C, D)
    b1f = (params["b1"] - params["mean"]) * scale + params["beta"]      # (1, D)
    w2 = params["w2"].astype(jnp.float32)                               # (D, K)
    b2 = params["b2"].astype(jnp.float32)                               # (1, K)

    D = w1f.shape[1]
    K = w2.shape[1]

    # ---- Tile / padding choices (lane-dense outputs, (8,128)-legal blocks) --
    TN = 8                                   # batch tile
    Dp = _round_up(D, 128)                   # lane-dense feature width
    Kp = _round_up(K, 128)                   # lane-dense class width
    TS = min(128, _round_up(HW, 8))          # spatial reduction tile
    HWp = _round_up(HW, TS)
    Np = _round_up(N, TN)

    w1f = jnp.pad(w1f, ((0, 0), (0, Dp - D)))
    b1f = jnp.pad(b1f, ((0, 0), (0, Dp - D)))
    w2 = jnp.pad(w2, ((0, Dp - D), (0, Kp - K)))
    b2 = jnp.pad(b2, ((0, 0), (0, Kp - K)))

    # (N, C, H, W) -> (N, H*W, C): spatial second-minor, channels on lanes.
    x_flat = x.transpose(0, 2, 3, 1).reshape(N, HW, C)
    if HWp != HW:
        fill = -jnp.inf if use_max_pool else 0.0
        x_flat = jnp.pad(x_flat, ((0, 0), (0, HWp - HW), (0, 0)),
                         constant_values=fill)
    if Np != N:
        x_flat = jnp.pad(x_flat, ((0, Np - N), (0, 0), (0, 0)))

    grid = (Np // TN, HWp // TS)

    # Rough VMEM budget (double-buffered x tiles + resident weights + outputs
    # + accumulator); keep well under the 64 MiB v7x physical VMEM.
    vmem_bytes = (2 * TN * TS * C * itemsize
                  + (C * Dp + Dp + Dp * Kp + Kp) * 4
                  + 2 * TN * (Dp + Kp) * itemsize
                  + TN * C * 4)
    vmem_limit = int(max(4 * 1024 * 1024, min(2 * vmem_bytes, 48 * 1024 * 1024)))

    cost = pl.CostEstimate(
        flops=int(2 * N * (C * Dp + Dp * Kp)),
        transcendentals=0,
        bytes_accessed=int(Np * HWp * C * itemsize
                           + (C * Dp + Dp * Kp + Dp + Kp) * 4
                           + Np * (Dp + Kp) * itemsize),
    )

    kernel = functools.partial(_new_branch_kernel,
                               use_max_pool=use_max_pool,
                               inv_hw=float(1.0 / HW))

    feat_p, logits_p = pl.pallas_call(
        kernel,
        out_shape=(
            jax.ShapeDtypeStruct((Np, Dp), dtype),
            jax.ShapeDtypeStruct((Np, Kp), dtype),
        ),
        grid_spec=pltpu.PrefetchScalarGridSpec(
            num_scalar_prefetch=0,
            grid=grid,
            in_specs=[
                pl.BlockSpec((TN, TS, C), lambda i, r: (i, r, 0)),   # x tiles
                pl.BlockSpec((C, Dp), lambda i, r: (0, 0)),          # w1 (resident)
                pl.BlockSpec((1, Dp), lambda i, r: (0, 0)),          # b1 (resident)
                pl.BlockSpec((Dp, Kp), lambda i, r: (0, 0)),         # w2 (resident)
                pl.BlockSpec((1, Kp), lambda i, r: (0, 0)),          # b2 (resident)
            ],
            out_specs=(
                pl.BlockSpec((TN, Dp), lambda i, r: (i, 0)),         # feat
                pl.BlockSpec((TN, Kp), lambda i, r: (i, 0)),         # logits
            ),
            scratch_shapes=[pltpu.VMEM((TN, C), jnp.float32)],
        ),
        compiler_params=pltpu.CompilerParams(
            dimension_semantics=("parallel", "arbitrary"),
            vmem_limit_bytes=vmem_limit,
        ),
        cost_estimate=cost,
    )(x_flat, w1f, b1f, w2, b2)

    feat = feat_p[:N, :D]
    logits = logits_p[:N, :K]

    predict = [feat]
    triplet = [feat]
    xent = [logits]
    features_map = x
    return predict, xent, triplet, {}, features_map


def init_params(key, input_dim, output_dim, num_classes):
    """Deterministic synthetic parameter init (mimics init_params shapes)."""
    k1, k2, k3, k4, k5 = jax.random.split(key, 5)
    params = {
        # fc Linear: weight stored transposed (in, out) for row-major matmul
        "w1": jax.random.normal(k1, (input_dim, output_dim), jnp.float32) * 0.02,
        "b1": jnp.zeros((1, output_dim), jnp.float32),
        # BatchNorm1d (inference stats / affine)
        "gamma": jnp.ones((1, output_dim), jnp.float32),
        "beta": jnp.zeros((1, output_dim), jnp.float32),
        "mean": jax.random.normal(k2, (1, output_dim), jnp.float32) * 0.1,
        "var": jax.nn.softplus(jax.random.normal(k3, (1, output_dim), jnp.float32)) + 0.5,
        # classifier Linear
        "w2": jax.random.normal(k4, (output_dim, num_classes), jnp.float32) * 0.02,
        "b2": jax.random.normal(k5, (1, num_classes), jnp.float32) * 0.01,
    }
    return params


def _reference_forward(x, params, use_max_pool, eps=1e-5):
    """Pure-JAX reference matching the PyTorch forward (eval mode)."""
    if use_max_pool:
        pooled = jnp.max(x, axis=(2, 3))
    else:
        pooled = jnp.mean(x, axis=(2, 3))
    y = pooled @ params["w1"] + params["b1"]
    y = ((y - params["mean"]) * jax.lax.rsqrt(params["var"] + eps)
         * params["gamma"] + params["beta"])
    y = jnp.maximum(y, 0.0)
    logits = y @ params["w2"] + params["b2"]
    return y, logits


if __name__ == "__main__":
    key = jax.random.PRNGKey(0)
    kx, kp = jax.random.split(key)

    # Small shapes consistent with the module: batch=2, input_dim(C)=4,
    # spatial=16x16, global_dim=32, num_classes=8.
    N, C, H, W = 2, 4, 16, 16
    GLOBAL_DIM, NUM_CLASSES = 32, 8

    x = jax.random.normal(kx, (N, C, H, W), jnp.float32)
    params = init_params(kp, input_dim=C, output_dim=GLOBAL_DIM,
                         num_classes=NUM_CLASSES)

    for use_max in (False, True):
        predict, xent, triplet, extra, features_map = new_branch_forward(
            x, params, use_max_pool=use_max)

        feat = jax.block_until_ready(predict[0])
        logits = jax.block_until_ready(xent[0])
        jax.block_until_ready(features_map)

        # Shapes match the PyTorch forward contract.
        assert feat.shape == (N, GLOBAL_DIM)
        assert triplet[0].shape == (N, GLOBAL_DIM)
        assert logits.shape == (N, NUM_CLASSES)
        assert features_map.shape == (N, C, H, W)
        assert extra == {}

        # Numerics match the unfused reference (BN fold is algebraic identity).
        feat_ref, logits_ref = _reference_forward(x, params, use_max)
        assert jnp.allclose(feat, feat_ref, atol=1e-4, rtol=1e-4), \
            f"feat mismatch (max_pool={use_max})"
        assert jnp.allclose(logits, logits_ref, atol=1e-4, rtol=1e-4), \
            f"logits mismatch (max_pool={use_max})"

    print("KERNEL_OK")
</pallas_src>

<mosaic_0001>
module attributes {stable_mosaic.version = 11 : i64} {
  func.func @_new_branch_kernel(%arg0: i32, %arg1: i32, %arg2: memref<8x128x4xf32, #tpu.memory_space<vmem>>, %arg3: memref<4x128xf32, #tpu.memory_space<vmem>>, %arg4: memref<1x128xf32, #tpu.memory_space<vmem>>, %arg5: memref<128x128xf32, #tpu.memory_space<vmem>>, %arg6: memref<1x128xf32, #tpu.memory_space<vmem>>, %arg7: memref<8x128xf32, #tpu.memory_space<vmem>>, %arg8: memref<8x128xf32, #tpu.memory_space<vmem>>, %arg9: memref<8x4xf32, #tpu.memory_space<vmem>>) attributes {dimension_semantics = [#tpu.dimension_semantics<parallel>, #tpu.dimension_semantics<arbitrary>], iteration_bounds = array<i64: 1, 2>, scalar_prefetch = 0 : i64, scratch_operands = 1 : i64, tpu.core_type = #tpu.core_type<tc>, window_params = [{transform_indices = @transform_0, window_bounds = array<i64: 8, 128, 4>}, {pipeline_mode = #tpu.pipeline_mode<synchronous>, transform_indices = @transform_1, window_bounds = array<i64: 4, 128>}, {pipeline_mode = #tpu.pipeline_mode<synchronous>, transform_indices = @transform_2, window_bounds = array<i64: 1, 128>}, {pipeline_mode = #tpu.pipeline_mode<synchronous>, transform_indices = @transform_3, window_bounds = array<i64: 128, 128>}, {pipeline_mode = #tpu.pipeline_mode<synchronous>, transform_indices = @transform_4, window_bounds = array<i64: 1, 128>}, {transform_indices = @transform_5, window_bounds = array<i64: 8, 128>}, {transform_indices = @transform_6, window_bounds = array<i64: 8, 128>}]} {
    %c0_i32 = arith.constant 0 : i32
    %0 = arith.cmpi eq, %arg1, %c0_i32 : i32
    %1 = arith.extui %0 : i1 to i32
    %c0_i32_0 = arith.constant 0 : i32
    %2 = arith.cmpi ne, %1, %c0_i32_0 : i32
    scf.if %2 {
      %cst_8 = arith.constant 0.000000e+00 : f32
      %11 = vector.broadcast %cst_8 : f32 to vector<8x4xf32>
      %c0_9 = arith.constant 0 : index
      %c0_10 = arith.constant 0 : index
      %12 = vector.load %arg9[%c0_9, %c0_10] : memref<8x4xf32, #tpu.memory_space<vmem>>, vector<8x4xf32>
      tpu.vector_store %arg9[%c0_9, %c0_10], %11 {strides = array<i32>} : memref<8x4xf32, #tpu.memory_space<vmem>>, vector<8x4xf32>,
    } else {
    }
    %c0 = arith.constant 0 : index
    %c0_1 = arith.constant 0 : index
    %c0_2 = arith.constant 0 : index
    %3 = vector.load %arg2[%c0, %c0_1, %c0_2] : memref<8x128x4xf32, #tpu.memory_space<vmem>>, vector<8x128x4xf32>
    %c0_3 = arith.constant 0 : index
    %c0_4 = arith.constant 0 : index
    %4 = vector.load %arg9[%c0_3, %c0_4] : memref<8x4xf32, #tpu.memory_space<vmem>>, vector<8x4xf32>
    %cst = arith.constant dense<0.000000e+00> : vector<8x4xf32>
    %5 = vector.multi_reduction <add>, %3, %cst [1] : vector<8x128x4xf32> to vector<8x4xf32>
    %6 = arith.addf %4, %5 : vector<8x4xf32>
    %c0_5 = arith.constant 0 : index
    %c0_6 = arith.constant 0 : index
    %7 = vector.load %arg9[%c0_5, %c0_6] : memref<8x4xf32, #tpu.memory_space<vmem>>, vector<8x4xf32>
    tpu.vector_store %arg9[%c0_5, %c0_6], %6 {strides = array<i32>} : memref<8x4xf32, #tpu.memory_space<vmem>>, vector<8x4xf32>,
    %c1_i32 = arith.constant 1 : i32
    %8 = arith.cmpi eq, %arg1, %c1_i32 : i32
    %9 = arith.extui %8 : i1 to i32
    %c0_i32_7 = arith.constant 0 : i32
    %10 = arith.cmpi ne, %9, %c0_i32_7 : i32
    scf.if %10 {
      %c0_8 = arith.constant 0 : index
      %c0_9 = arith.constant 0 : index
      %11 = vector.load %arg9[%c0_8, %c0_9] : memref<8x4xf32, #tpu.memory_space<vmem>>, vector<8x4xf32>
      %cst_10 = arith.constant 3.906250e-03 : f32
      %12 = vector.broadcast %cst_10 : f32 to vector<8x4xf32>
      %13 = arith.mulf %11, %12 : vector<8x4xf32>
      %c0_11 = arith.constant 0 : index
      %c0_12 = arith.constant 0 : index
      %14 = vector.load %arg3[%c0_11, %c0_12] : memref<4x128xf32, #tpu.memory_space<vmem>>, vector<4x128xf32>
      %cst_13 = arith.constant dense<0.000000e+00> : vector<8x128xf32>
      %15 = tpu.matmul %13, %14, %cst_13 {dimension_numbers = #tpu.dot_dimension_numbers<[1], [0], [0], [1], [0, 0, 1, 1], [], []>} : vector<8x4xf32>, vector<4x128xf32>, vector<8x128xf32> -> vector<8x128xf32>
      %c0_14 = arith.constant 0 : index
      %c0_15 = arith.constant 0 : index
      %16 = vector.load %arg4[%c0_14, %c0_15] : memref<1x128xf32, #tpu.memory_space<vmem>>, vector<1x128xf32>
      %17 = vector.broadcast %16 : vector<1x128xf32> to vector<8x128xf32>
      %18 = arith.addf %15, %17 : vector<8x128xf32>
      %cst_16 = arith.constant 0.000000e+00 : f32
      %19 = vector.broadcast %cst_16 : f32 to vector<8x128xf32>
      %20 = arith.maximumf %18, %19 : vector<8x128xf32>
      %c0_17 = arith.constant 0 : index
      %c0_18 = arith.constant 0 : index
      %21 = vector.load %arg7[%c0_17, %c0_18] : memref<8x128xf32, #tpu.memory_space<vmem>>, vector<8x128xf32>
      tpu.vector_store %arg7[%c0_17, %c0_18], %20 {strides = array<i32>} : memref<8x128xf32, #tpu.memory_space<vmem>>, vector<8x128xf32>,
      %c0_19 = arith.constant 0 : index
      %c0_20 = arith.constant 0 : index
      %22 = vector.load %arg5[%c0_19, %c0_20] : memref<128x128xf32, #tpu.memory_space<vmem>>, vector<128x128xf32>
      %cst_21 = arith.constant dense<0.000000e+00> : vector<8x128xf32>
      %23 = tpu.matmul %20, %22, %cst_21 {dimension_numbers = #tpu.dot_dimension_numbers<[1], [0], [0], [1], [0, 0, 1, 1], [], []>} : vector<8x128xf32>, vector<128x128xf32>, vector<8x128xf32> -> vector<8x128xf32>
      %c0_22 = arith.constant 0 : index
      %c0_23 = arith.constant 0 : index
      %24 = vector.load %arg6[%c0_22, %c0_23] : memref<1x128xf32, #tpu.memory_space<vmem>>, vector<1x128xf32>
      %25 = vector.broadcast %24 : vector<1x128xf32> to vector<8x128xf32>
      %26 = arith.addf %23, %25 : vector<8x128xf32>
      %c0_24 = arith.constant 0 : index
      %c0_25 = arith.constant 0 : index
      %27 = vector.load %arg8[%c0_24, %c0_25] : memref<8x128xf32, #tpu.memory_space<vmem>>, vector<8x128xf32>
      tpu.vector_store %arg8[%c0_24, %c0_25], %26 {strides = array<i32>} : memref<8x128xf32, #tpu.memory_space<vmem>>, vector<8x128xf32>,
    } else {
    }
    return
  }
  func.func @transform_0(%arg0: i32, %arg1: i32) -> (i32, i32, i32) {
    %c0_i32 = arith.constant 0 : i32
    %c0_i32_0 = arith.constant 0 : i32
    return %arg0, %arg1, %c0_i32 : i32, i32, i32
  }
  func.func @transform_1(%arg0: i32, %arg1: i32) -> (i32, i32) {
    %c0_i32 = arith.constant 0 : i32
    %c0_i32_0 = arith.constant 0 : i32
    %c0_i32_1 = arith.constant 0 : i32
    return %c0_i32, %c0_i32_0 : i32, i32
  }
  func.func @transform_2(%arg0: i32, %arg1: i32) -> (i32, i32) {
    %c0_i32 = arith.constant 0 : i32
    %c0_i32_0 = arith.constant 0 : i32
    %c0_i32_1 = arith.constant 0 : i32
    return %c0_i32, %c0_i32_0 : i32, i32
  }
  func.func @transform_3(%arg0: i32, %arg1: i32) -> (i32, i32) {
    %c0_i32 = arith.constant 0 : i32
    %c0_i32_0 = arith.constant 0 : i32
    %c0_i32_1 = arith.constant 0 : i32
    return %c0_i32, %c0_i32_0 : i32, i32
  }
  func.func @transform_4(%arg0: i32, %arg1: i32) -> (i32, i32) {
    %c0_i32 = arith.constant 0 : i32
    %c0_i32_0 = arith.constant 0 : i32
    %c0_i32_1 = arith.constant 0 : i32
    return %c0_i32, %c0_i32_0 : i32, i32
  }
  func.func @transform_5(%arg0: i32, %arg1: i32) -> (i32, i32) {
    %c0_i32 = arith.constant 0 : i32
    %c0_i32_0 = arith.constant 0 : i32
    return %arg0, %c0_i32 : i32, i32
  }
  func.func @transform_6(%arg0: i32, %arg1: i32) -> (i32, i32) {
    %c0_i32 = arith.constant 0 : i32
    %c0_i32_0 = arith.constant 0 : i32
    return %arg0, %c0_i32 : i32, i32
  }
}

</mosaic_0001>

<llo_original>
// kernel: tpu_custom_call.1
$region0: #{tpu_custom_call.1}
  #allocation0 [shape = 'u32[]', space=smem, size = 0x4, offset = 0x4, fixed_abs, tag = 'smem constant byte address 0x4 - core index']
  #allocation1 [shape = 'u32[144,128]{1,0:T(1,128)}', space=vmem, size = 0x12000, scoped, tag = 'internal scratch']
  #allocation2 [shape = 'f32[8,4]{1,0:T(8,128)}', space=vmem, size = 0x1000, scoped, tag = 'scratch operand']
  %s0 = inlined_call_operand.vmem [shape: f32[8,256,4], index: 0, kind: input, shape index: {}]
  %s1 = inlined_call_operand.vmem [shape: f32[4,128], index: 1, kind: input, shape index: {}]
  %s2 = inlined_call_operand.vmem [shape: f32[1,128], index: 2, kind: input, shape index: {}]
  %s3 = inlined_call_operand.vmem [shape: f32[128,128], index: 3, kind: input, shape index: {}]
  %s4 = inlined_call_operand.vmem [shape: f32[1,128], index: 4, kind: input, shape index: {}]
  %s5 = inlined_call_operand.hbm [shape: f32[8,128], index: 5, kind: output, shape index: {0}]
  %s6 = inlined_call_operand.hbm [shape: f32[8,128], index: 6, kind: output, shape index: {1}]
  %7 = xla_tuple %s5, %s6
  %s8 = sld [smem:[#allocation0]]
  $region107: #{tpu_custom_call.1} parent=0
    _
  %s10 = ssub.s32 1, %s8
  %s11 = scalar_select 0, %s10, %s8
  $region1: #{tpu_custom_call.1} parent=0
    #allocation3 [shape = 'u8[1048576]{0}', space=vmem, size = 0x100000, scoped, tag = 'input window, operand 0']
    #allocation4 [shape = 'u8[4096]{0}', space=vmem, size = 0x1000, scoped, tag = 'output window, operand 0, single buffered']
    #allocation5 [shape = 's32[2]{0}', space=sflag, size = 0x8, scoped, tag = 'scoped memory for tpu_custom_call.1']
    #allocation6 [shape = 'u8[4096]{0}', space=vmem, size = 0x1000, scoped, tag = 'output window, operand 1, single buffered']
    #allocation7 [shape = 's32[1]{0}', space=sflag, size = 0x4, scoped, tag = 'scoped memory for tpu_custom_call.1']
    %12 = vsyncpa [#allocation5], 0
    %13 = vsyncpa [#allocation7], 0
    loop: start=0, step=1, limit=4
    $region2: #{tpu_custom_call.1} parent=1 // loop_pre_header
      _
    $region3: #{tpu_custom_call.1} parent=1 // loop_header
      %s15 = sphi 0, %s19
      %p16 = scmp.ge.s32.totalorder %s15, 4
      %s22 = sphi 0, %s34
      %s23 = sphi 0, %s30
      %s24 = sphi 0, %s22
      %s25 = sphi 0, %s23
      %s26 = sphi 0, %s24
      %s27 = sphi 0, %s25
      %s39 = sphi 0, %s41
      %s42 = sphi 0, %s39
      %s43 = sphi 0, %s42
      %s59 = sphi 0, %s43
      %s63 = sphi 0, %s63
      %s65 = sphi 0, %s63
      %s66 = sphi 0, %s65
      %s80 = sphi 0, %s66
      %s84 = sphi 0, %s84
      %s86 = sphi 0, %s84
      %s87 = sphi 0, %s86
      %s101 = sphi 0, %s87
      %s105 = sphi 0, %s105
      %s107 = sphi 0, %s105
      %s108 = sphi 0, %s107
      %s122 = sphi 0, %s108
      %s126 = sphi 0, %s126
      %s128 = sphi 0, %s126
      %s129 = sphi 0, %s128
      %s143 = sphi 0, %s129
      %s149 = sphi 0, %s151
      %s152 = sphi 0, %s149
      %s153 = sphi 0, %s152
      %s169 = sphi 0, %s153
      %s175 = sphi 0, %s177
      %s178 = sphi 0, %s175
      %s179 = sphi 0, %s178
      %s195 = sphi 0, %s179
    $region4: #{tpu_custom_call.1} parent=1 // loop_header_branch
      %18 = sbr.rel (%p16) target = $region8
    $region5: #{tpu_custom_call.1} parent=1 // loop_body
      %s20 = ssub.s32 %s15, 1
      %s21 = ssub.s32 %s15, 2
      %s28 = sadd.s32 1, %s23
      %p29 = scmp.ge.s32.totalorder %s28, 2
      %s30 = scalar_select %p29, 0, %s28
      %s31 = sadd.s32 1, %s22
      %s32 = scalar_select %p29, %s31, %s22
      %p33 = scmp.ge.s32.totalorder %s32, 1
      %s34 = scalar_select %p33, 0, %s32
      %s35 = ssub.s32 %s22, %s34
      %s36 = ssub.s32 %s23, %s30
      %s37 = sor.u32 %s35, %s36
      %p38 = scmp.eq.s32.totalorder %s37, 0
      %s40 = sadd.s32 %s39, 1
      %s41 = scalar_select %p38, %s39, %s40
      %p44 = pneg %p38
      %p45 = scmp.eq.s32.totalorder %s15, 1
      %p46 = por %p44, %p45
      %p47 = scmp.ne.s32.totalorder %s39, %s42
      %p48 = scmp.eq.s32.totalorder %s15, 0
      %p49 = por %p47, %p48
      %p50 = scmp.ne.s32.totalorder %s39, %s42
      %p51 = scmp.eq.s32.totalorder %s20, 1
      %p52 = por %p50, %p51
      %p53 = scmp.ne.s32.totalorder %s42, %s43
      %p54 = scmp.eq.s32.totalorder %s20, 0
      %p55 = por %p53, %p54
      %p56 = scmp.ne.s32.totalorder %s42, %s43
      %p57 = scmp.eq.s32.totalorder %s21, 1
      %p58 = por %p56, %p57
      %p60 = scmp.ne.s32.totalorder %s43, %s59
      %p61 = scmp.eq.s32.totalorder %s21, 0
      %p62 = por %p60, %p61
      %s64 = sadd.s32 %s63, 1
      %p67 = scmp.eq.s32.totalorder %s15, 1
      %p68 = scmp.ne.s32.totalorder %s63, %s65
      %p69 = scmp.eq.s32.totalorder %s15, 0
      %p70 = por %p68, %p69
      %p71 = scmp.ne.s32.totalorder %s63, %s65
      %p72 = scmp.eq.s32.totalorder %s20, 1
      %p73 = por %p71, %p72
      %p74 = scmp.ne.s32.totalorder %s65, %s66
      %p75 = scmp.eq.s32.totalorder %s20, 0
      %p76 = por %p74, %p75
      %p77 = scmp.ne.s32.totalorder %s65, %s66
      %p78 = scmp.eq.s32.totalorder %s21, 1
      %p79 = por %p77, %p78
      %p81 = scmp.ne.s32.totalorder %s66, %s80
      %p82 = scmp.eq.s32.totalorder %s21, 0
      %p83 = por %p81, %p82
      %s85 = sadd.s32 %s84, 1
      %p88 = scmp.eq.s32.totalorder %s15, 1
      %p89 = scmp.ne.s32.totalorder %s84, %s86
      %p90 = scmp.eq.s32.totalorder %s15, 0
      %p91 = por %p89, %p90
      %p92 = scmp.ne.s32.totalorder %s84, %s86
      %p93 = scmp.eq.s32.totalorder %s20, 1
      %p94 = por %p92, %p93
      %p95 = scmp.ne.s32.totalorder %s86, %s87
      %p96 = scmp.eq.s32.totalorder %s20, 0
      %p97 = por %p95, %p96
      %p98 = scmp.ne.s32.totalorder %s86, %s87
      %p99 = scmp.eq.s32.totalorder %s21, 1
      %p100 = por %p98, %p99
      %p102 = scmp.ne.s32.totalorder %s87, %s101
      %p103 = scmp.eq.s32.totalorder %s21, 0
      %p104 = por %p102, %p103
      %s106 = sadd.s32 %s105, 1
      %p109 = scmp.eq.s32.totalorder %s15, 1
      %p110 = scmp.ne.s32.totalorder %s105, %s107
      %p111 = scmp.eq.s32.totalorder %s15, 0
      %p112 = por %p110, %p111
      %p113 = scmp.ne.s32.totalorder %s105, %s107
      %p114 = scmp.eq.s32.totalorder %s20, 1
      %p115 = por %p113, %p114
      %p116 = scmp.ne.s32.totalorder %s107, %s108
      %p117 = scmp.eq.s32.totalorder %s20, 0
      %p118 = por %p116, %p117
      %p119 = scmp.ne.s32.totalorder %s107, %s108
      %p120 = scmp.eq.s32.totalorder %s21, 1
      %p121 = por %p119, %p120
      %p123 = scmp.ne.s32.totalorder %s108, %s122
      %p124 = scmp.eq.s32.totalorder %s21, 0
      %p125 = por %p123, %p124
      %s127 = sadd.s32 %s126, 1
      %p130 = scmp.eq.s32.totalorder %s15, 1
      %p131 = scmp.ne.s32.totalorder %s126, %s128
      %p132 = scmp.eq.s32.totalorder %s15, 0
      %p133 = por %p131, %p132
      %p134 = scmp.ne.s32.totalorder %s126, %s128
      %p135 = scmp.eq.s32.totalorder %s20, 1
      %p136 = por %p134, %p135
      %p137 = scmp.ne.s32.totalorder %s128, %s129
      %p138 = scmp.eq.s32.totalorder %s20, 0
      %p139 = por %p137, %p138
      %p140 = scmp.ne.s32.totalorder %s128, %s129
      %p141 = scmp.eq.s32.totalorder %s21, 1
      %p142 = por %p140, %p141
      %p144 = scmp.ne.s32.totalorder %s129, %s143
      %p145 = scmp.eq.s32.totalorder %s21, 0
      %p146 = por %p144, %p145
      %s147 = ssub.s32 %s22, %s34
      %p148 = scmp.eq.s32.totalorder %s147, 0
      %s150 = sadd.s32 %s149, 1
      %s151 = scalar_select %p148, %s149, %s150
      %p154 = pneg %p148
      %p155 = scmp.eq.s32.totalorder %s15, 1
      %p156 = por %p154, %p155
      %p157 = scmp.ne.s32.totalorder %s149, %s152
      %p158 = scmp.eq.s32.totalorder %s15, 0
      %p159 = por %p157, %p158
      %p160 = scmp.ne.s32.totalorder %s149, %s152
      %p161 = scmp.eq.s32.totalorder %s20, 1
      %p162 = por %p160, %p161
      %p163 = scmp.ne.s32.totalorder %s152, %s153
      %p164 = scmp.eq.s32.totalorder %s20, 0
      %p165 = por %p163, %p164
      %p166 = scmp.ne.s32.totalorder %s152, %s153
      %p167 = scmp.eq.s32.totalorder %s21, 1
      %p168 = por %p166, %p167
      %p170 = scmp.ne.s32.totalorder %s153, %s169
      %p171 = scmp.eq.s32.totalorder %s21, 0
      %p172 = por %p170, %p171
      %s173 = ssub.s32 %s22, %s34
      %p174 = scmp.eq.s32.totalorder %s173, 0
      %s176 = sadd.s32 %s175, 1
      %s177 = scalar_select %p174, %s175, %s176
      %p180 = pneg %p174
      %p181 = scmp.eq.s32.totalorder %s15, 1
      %p182 = por %p180, %p181
      %p183 = scmp.ne.s32.totalorder %s175, %s178
      %p184 = scmp.eq.s32.totalorder %s15, 0
      %p185 = por %p183, %p184
      %p186 = scmp.ne.s32.totalorder %s175, %s178
      %p187 = scmp.eq.s32.totalorder %s20, 1
      %p188 = por %p186, %p187
      %p189 = scmp.ne.s32.totalorder %s178, %s179
      %p190 = scmp.eq.s32.totalorder %s20, 0
      %p191 = por %p189, %p190
      %p192 = scmp.ne.s32.totalorder %s178, %s179
      %p193 = scmp.eq.s32.totalorder %s21, 1
      %p194 = por %p192, %p193
      %p196 = scmp.ne.s32.totalorder %s179, %s195
      %p197 = scmp.eq.s32.totalorder %s21, 0
      %p198 = por %p196, %p197
      %p199 = scmp.le.s32.totalorder 1, %s15
      %p200 = scmp.lt.s32.totalorder %s15, 3
      %p201 = pnand %p199, %p200
      %p202 = pneg %p201
      // Predicated region
      $region9: #{tpu_custom_call.1} parent=5 // pred_check
        _
      $region10: #{tpu_custom_call.1} parent=5 // pred_check_branch
        %204 = sbr.rel (%p201) target = $region12
      $region11: #{tpu_custom_call.1} parent=5 // pred_region
        %s205 = ssub.s32 %s15, 1
        // Predicated region
        $region13: #{tpu_custom_call.1} parent=11 // pred_check
          %p206 = pneg %p76
        $region14: #{tpu_custom_call.1} parent=11 // pred_check_branch
          %208 = sbr.rel (%p206) target = $region16
        $region15: #{tpu_custom_call.1} parent=11 // pred_region
          _
        $region16: #{tpu_custom_call.1} parent=11 // pred_fallthru
          _
        // Predicated region
        $region17: #{tpu_custom_call.1} parent=11 // pred_check
          %p209 = pneg %p97
        $region18: #{tpu_custom_call.1} parent=11 // pred_check_branch
          %211 = sbr.rel (%p209) target = $region20
        $region19: #{tpu_custom_call.1} parent=11 // pred_region
          _
        $region20: #{tpu_custom_call.1} parent=11 // pred_fallthru
          _
        // Predicated region
        $region21: #{tpu_custom_call.1} parent=11 // pred_check
          %p212 = pneg %p118
        $region22: #{tpu_custom_call.1} parent=11 // pred_check_branch
          %214 = sbr.rel (%p212) target = $region24
        $region23: #{tpu_custom_call.1} parent=11 // pred_region
          _
        $region24: #{tpu_custom_call.1} parent=11 // pred_fallthru
          _
        // Predicated region
        $region25: #{tpu_custom_call.1} parent=11 // pred_check
          %p215 = pneg %p139
        $region26: #{tpu_custom_call.1} parent=11 // pred_check_branch
          %217 = sbr.rel (%p215) target = $region28
        $region27: #{tpu_custom_call.1} parent=11 // pred_region
          _
        $region28: #{tpu_custom_call.1} parent=11 // pred_fallthru
          _
      $region12: #{tpu_custom_call.1} parent=5 // pred_fallthru
        _
      %p218 = scmp.lt.s32.totalorder %s15, 2
      // Predicated region
      $region29: #{tpu_custom_call.1} parent=5 // pred_check
        %p219 = pneg %p218
      $region30: #{tpu_custom_call.1} parent=5 // pred_check_branch
        %221 = sbr.rel (%p219) target = $region32
      $region31: #{tpu_custom_call.1} parent=5 // pred_region
        // Predicated region
        $region33: #{tpu_custom_call.1} parent=31 // pred_check
          %p222 = pneg %p49
        $region34: #{tpu_custom_call.1} parent=31 // pred_check_branch
          %224 = sbr.rel (%p222) target = $region36
        $region35: #{tpu_custom_call.1} parent=31 // pred_region
          %s225 = sand.u32 %s39, 1
          %s226 = sand.u32 %s39, 1
          %s227 = smul.addr %s226, 1024
          %s228 = scalar_lea.vmem [#allocation3], %s227
          %s229 = smul.u32 8, %s22
          %s230 = smul.u32 16, %s23
          %s231 = smul.addr %s229, 32
          %s232 = sadd.s32 %s230, %s231
          %s233 = smul.addr %s232, 8
          %s234 = scalar_lea.vmem %s0, %s233
          // Predicated region
          $region37: #{tpu_custom_call.1} parent=35 // pred_check
            _
          $region38: #{tpu_custom_call.1} parent=35 // pred_check_branch
            %236 = sbr.rel (0) target = $region40
          $region39: #{tpu_custom_call.1} parent=35 // pred_region
            // Predicated region
            $region41: #{tpu_custom_call.1} parent=39 // pred_check
              _
            $region42: #{tpu_custom_call.1} parent=39 // pred_check_branch
              %238 = sbr.rel (0) target = $region44
            $region43: #{tpu_custom_call.1} parent=39 // pred_region
              // Predicated region
              $region56: #{tpu_custom_call.1} parent=43 // pred_check
                _
              $region57: #{tpu_custom_call.1} parent=43 // pred_check_branch
                %507 = sbr.rel (0) target = $region59
              $region58: #{tpu_custom_call.1} parent=43 // pred_region
                loop: start=0, step=1, limit=1
                $region60: #{tpu_custom_call.1} parent=58 // loop_pre_header
                  _
                $region61: #{tpu_custom_call.1} parent=58 // loop_header
                  %s509 = sphi 0, %s513
                  %p510 = scmp.ge.s32.totalorder %s509, 1
                  %s514 = sphi %s234, %s234
                  %s515 = sphi %s228, %s228
                $region62: #{tpu_custom_call.1} parent=58 // loop_header_branch
                  %512 = sbr.rel (%p510) target = $region66
                $region63: #{tpu_custom_call.1} parent=58 // loop_body
                  %v516 = vld [vmem:[%s514] sm:$0xff]
                  %517 = vst [vmem:[%s515] sm:$0xff] %v516
                  %v518 = vld [vmem:[%s514 + $0x8] sm:$0xff]
                  %519 = vst [vmem:[%s515 + $0x8] sm:$0xff] %v518
                  %v520 = vld [vmem:[%s514 + $0x10] sm:$0xff]
                  %521 = vst [vmem:[%s515 + $0x10] sm:$0xff] %v520
                  %v522 = vld [vmem:[%s514 + $0x18] sm:$0xff]
                  %523 = vst [vmem:[%s515 + $0x18] sm:$0xff] %v522
                  %v524 = vld [vmem:[%s514 + $0x20] sm:$0xff]
                  %525 = vst [vmem:[%s515 + $0x20] sm:$0xff] %v524
                  %v526 = vld [vmem:[%s514 + $0x28] sm:$0xff]
                  %527 = vst [vmem:[%s515 + $0x28] sm:$0xff] %v526
                  %v528 = vld [vmem:[%s514 + $0x30] sm:$0xff]
                  %529 = vst [vmem:[%s515 + $0x30] sm:$0xff] %v528
                  %v530 = vld [vmem:[%s514 + $0x38] sm:$0xff]
                  %531 = vst [vmem:[%s515 + $0x38] sm:$0xff] %v530
                  %v532 = vld [vmem:[%s514 + $0x40] sm:$0xff]
                  %533 = vst [vmem:[%s515 + $0x40] sm:$0xff] %v532
                  %v534 = vld [vmem:[%s514 + $0x48] sm:$0xff]
                  %535 = vst [vmem:[%s515 + $0x48] sm:$0xff] %v534
                  %v536 = vld [vmem:[%s514 + $0x50] sm:$0xff]
                  %537 = vst [vmem:[%s515 + $0x50] sm:$0xff] %v536
                  %v538 = vld [vmem:[%s514 + $0x58] sm:$0xff]
                  %539 = vst [vmem:[%s515 + $0x58] sm:$0xff] %v538
                  %v540 = vld [vmem:[%s514 + $0x60] sm:$0xff]
                  %541 = vst [vmem:[%s515 + $0x60] sm:$0xff] %v540
                  %v542 = vld [vmem:[%s514 + $0x68] sm:$0xff]
                  %543 = vst [vmem:[%s515 + $0x68] sm:$0xff] %v542
                  %v544 = vld [vmem:[%s514 + $0x70] sm:$0xff]
                  %545 = vst [vmem:[%s515 + $0x70] sm:$0xff] %v544
                  %v546 = vld [vmem:[%s514 + $0x78] sm:$0xff]
                  %547 = vst [vmem:[%s515 + $0x78] sm:$0xff] %v546
                  %v548 = vld [vmem:[%s514 + $0x100] sm:$0xff]
                  %549 = vst [vmem:[%s515 + $0x80] sm:$0xff] %v548
                  %v550 = vld [vmem:[%s514 + $0x108] sm:$0xff]
                  %551 = vst [vmem:[%s515 + $0x88] sm:$0xff] %v550
                  %v552 = vld [vmem:[%s514 + $0x110] sm:$0xff]
                  %553 = vst [vmem:[%s515 + $0x90] sm:$0xff] %v552
                  %v554 = vld [vmem:[%s514 + $0x118] sm:$0xff]
                  %555 = vst [vmem:[%s515 + $0x98] sm:$0xff] %v554
                  %v556 = vld [vmem:[%s514 + $0x120] sm:$0xff]
                  %557 = vst [vmem:[%s515 + $0xa0] sm:$0xff] %v556
                  %v558 = vld [vmem:[%s514 + $0x128] sm:$0xff]
                  %559 = vst [vmem:[%s515 + $0xa8] sm:$0xff] %v558
                  %v560 = vld [vmem:[%s514 + $0x130] sm:$0xff]
                  %561 = vst [vmem:[%s515 + $0xb0] sm:$0xff] %v560
                  %v562 = vld [vmem:[%s514 + $0x138] sm:$0xff]
                  %563 = vst [vmem:[%s515 + $0xb8] sm:$0xff] %v562
                  %v564 = vld [vmem:[%s514 + $0x140] sm:$0xff]
                  %565 = vst [vmem:[%s515 + $0xc0] sm:$0xff] %v564
                  %v566 = vld [vmem:[%s514 + $0x148] sm:$0xff]
                  %567 = vst [vmem:[%s515 + $0xc8] sm:$0xff] %v566
                  %v568 = vld [vmem:[%s514 + $0x150] sm:$0xff]
                  %569 = vst [vmem:[%s515 + $0xd0] sm:$0xff] %v568
                  %v570 = vld [vmem:[%s514 + $0x158] sm:$0xff]
                  %571 = vst [vmem:[%s515 + $0xd8] sm:$0xff] %v570
                  %v572 = vld [vmem:[%s514 + $0x160] sm:$0xff]
                  %573 = vst [vmem:[%s515 + $0xe0] sm:$0xff] %v572
                  %v574 = vld [vmem:[%s514 + $0x168] sm:$0xff]
                  %575 = vst [vmem:[%s515 + $0xe8] sm:$0xff] %v574
                  %v576 = vld [vmem:[%s514 + $0x170] sm:$0xff]
                  %577 = vst [vmem:[%s515 + $0xf0] sm:$0xff] %v576
                  %v578 = vld [vmem:[%s514 + $0x178] sm:$0xff]
                  %579 = vst [vmem:[%s515 + $0xf8] sm:$0xff] %v578
                  %v580 = vld [vmem:[%s514 + $0x200] sm:$0xff]
                  %581 = vst [vmem:[%s515 + $0x100] sm:$0xff] %v580
                  %v582 = vld [vmem:[%s514 + $0x208] sm:$0xff]
                  %583 = vst [vmem:[%s515 + $0x108] sm:$0xff] %v582
                  %v584 = vld [vmem:[%s514 + $0x210] sm:$0xff]
                  %585 = vst [vmem:[%s515 + $0x110] sm:$0xff] %v584
                  %v586 = vld [vmem:[%s514 + $0x218] sm:$0xff]
                  %587 = vst [vmem:[%s515 + $0x118] sm:$0xff] %v586
                  %v588 = vld [vmem:[%s514 + $0x220] sm:$0xff]
                  %589 = vst [vmem:[%s515 + $0x120] sm:$0xff] %v588
                  %v590 = vld [vmem:[%s514 + $0x228] sm:$0xff]
                  %591 = vst [vmem:[%s515 + $0x128] sm:$0xff] %v590
                  %v592 = vld [vmem:[%s514 + $0x230] sm:$0xff]
                  %593 = vst [vmem:[%s515 + $0x130] sm:$0xff] %v592
                  %v594 = vld [vmem:[%s514 + $0x238] sm:$0xff]
                  %595 = vst [vmem:[%s515 + $0x138] sm:$0xff] %v594
                  %v596 = vld [vmem:[%s514 + $0x240] sm:$0xff]
                  %597 = vst [vmem:[%s515 + $0x140] sm:$0xff] %v596
                  %v598 = vld [vmem:[%s514 + $0x248] sm:$0xff]
                  %599 = vst [vmem:[%s515 + $0x148] sm:$0xff] %v598
                  %v600 = vld [vmem:[%s514 + $0x250] sm:$0xff]
                  %601 = vst [vmem:[%s515 + $0x150] sm:$0xff] %v600
                  %v602 = vld [vmem:[%s514 + $0x258] sm:$0xff]
                  %603 = vst [vmem:[%s515 + $0x158] sm:$0xff] %v602
                  %v604 = vld [vmem:[%s514 + $0x260] sm:$0xff]
                  %605 = vst [vmem:[%s515 + $0x160] sm:$0xff] %v604
                  %v606 = vld [vmem:[%s514 + $0x268] sm:$0xff]
                  %607 = vst [vmem:[%s515 + $0x168] sm:$0xff] %v606
                  %v608 = vld [vmem:[%s514 + $0x270] sm:$0xff]
                  %609 = vst [vmem:[%s515 + $0x170] sm:$0xff] %v608
                  %v610 = vld [vmem:[%s514 + $0x278] sm:$0xff]
                  %611 = vst [vmem:[%s515 + $0x178] sm:$0xff] %v610
                  %v612 = vld [vmem:[%s514 + $0x300] sm:$0xff]
                  %613 = vst [vmem:[%s515 + $0x180] sm:$0xff] %v612
                  %v614 = vld [vmem:[%s514 + $0x308] sm:$0xff]
                  %615 = vst [vmem:[%s515 + $0x188] sm:$0xff] %v614
                  %v616 = vld [vmem:[%s514 + $0x310] sm:$0xff]
                  %617 = vst [vmem:[%s515 + $0x190] sm:$0xff] %v616
                  %v618 = vld [vmem:[%s514 + $0x318] sm:$0xff]
                  %619 = vst [vmem:[%s515 + $0x198] sm:$0xff] %v618
                  %v620 = vld [vmem:[%s514 + $0x320] sm:$0xff]
                  %621 = vst [vmem:[%s515 + $0x1a0] sm:$0xff] %v620
                  %v622 = vld [vmem:[%s514 + $0x328] sm:$0xff]
                  %623 = vst [vmem:[%s515 + $0x1a8] sm:$0xff] %v622
                  %v624 = vld [vmem:[%s514 + $0x330] sm:$0xff]
                  %625 = vst [vmem:[%s515 + $0x1b0] sm:$0xff] %v624
                  %v626 = vld [vmem:[%s514 + $0x338] sm:$0xff]
                  %627 = vst [vmem:[%s515 + $0x1b8] sm:$0xff] %v626
                  %v628 = vld [vmem:[%s514 + $0x340] sm:$0xff]
                  %629 = vst [vmem:[%s515 + $0x1c0] sm:$0xff] %v628
                  %v630 = vld [vmem:[%s514 + $0x348] sm:$0xff]
                  %631 = vst [vmem:[%s515 + $0x1c8] sm:$0xff] %v630
                  %v632 = vld [vmem:[%s514 + $0x350] sm:$0xff]
                  %633 = vst [vmem:[%s515 + $0x1d0] sm:$0xff] %v632
                  %v634 = vld [vmem:[%s514 + $0x358] sm:$0xff]
                  %635 = vst [vmem:[%s515 + $0x1d8] sm:$0xff] %v634
                  %v636 = vld [vmem:[%s514 + $0x360] sm:$0xff]
                  %637 = vst [vmem:[%s515 + $0x1e0] sm:$0xff] %v636
                  %v638 = vld [vmem:[%s514 + $0x368] sm:$0xff]
                  %639 = vst [vmem:[%s515 + $0x1e8] sm:$0xff] %v638
                  %v640 = vld [vmem:[%s514 + $0x370] sm:$0xff]
                  %641 = vst [vmem:[%s515 + $0x1f0] sm:$0xff] %v640
                  %v642 = vld [vmem:[%s514 + $0x378] sm:$0xff]
                  %643 = vst [vmem:[%s515 + $0x1f8] sm:$0xff] %v642
                  %v644 = vld [vmem:[%s514 + $0x400] sm:$0xff]
                  %645 = vst [vmem:[%s515 + $0x200] sm:$0xff] %v644
                  %v646 = vld [vmem:[%s514 + $0x408] sm:$0xff]
                  %647 = vst [vmem:[%s515 + $0x208] sm:$0xff] %v646
                  %v648 = vld [vmem:[%s514 + $0x410] sm:$0xff]
                  %649 = vst [vmem:[%s515 + $0x210] sm:$0xff] %v648
                  %v650 = vld [vmem:[%s514 + $0x418] sm:$0xff]
                  %651 = vst [vmem:[%s515 + $0x218] sm:$0xff] %v650
                  %v652 = vld [vmem:[%s514 + $0x420] sm:$0xff]
                  %653 = vst [vmem:[%s515 + $0x220] sm:$0xff] %v652
                  %v654 = vld [vmem:[%s514 + $0x428] sm:$0xff]
                  %655 = vst [vmem:[%s515 + $0x228] sm:$0xff] %v654
                  %v656 = vld [vmem:[%s514 + $0x430] sm:$0xff]
                  %657 = vst [vmem:[%s515 + $0x230] sm:$0xff] %v656
                  %v658 = vld [vmem:[%s514 + $0x438] sm:$0xff]
                  %659 = vst [vmem:[%s515 + $0x238] sm:$0xff] %v658
                  %v660 = vld [vmem:[%s514 + $0x440] sm:$0xff]
                  %661 = vst [vmem:[%s515 + $0x240] sm:$0xff] %v660
                  %v662 = vld [vmem:[%s514 + $0x448] sm:$0xff]
                  %663 = vst [vmem:[%s515 + $0x248] sm:$0xff] %v662
                  %v664 = vld [vmem:[%s514 + $0x450] sm:$0xff]
                  %665 = vst [vmem:[%s515 + $0x250] sm:$0xff] %v664
                  %v666 = vld [vmem:[%s514 + $0x458] sm:$0xff]
                  %667 = vst [vmem:[%s515 + $0x258] sm:$0xff] %v666
                  %v668 = vld [vmem:[%s514 + $0x460] sm:$0xff]
                  %669 = vst [vmem:[%s515 + $0x260] sm:$0xff] %v668
                  %v670 = vld [vmem:[%s514 + $0x468] sm:$0xff]
                  %671 = vst [vmem:[%s515 + $0x268] sm:$0xff] %v670
                  %v672 = vld [vmem:[%s514 + $0x470] sm:$0xff]
                  %673 = vst [vmem:[%s515 + $0x270] sm:$0xff] %v672
                  %v674 = vld [vmem:[%s514 + $0x478] sm:$0xff]
                  %675 = vst [vmem:[%s515 + $0x278] sm:$0xff] %v674
                  %v676 = vld [vmem:[%s514 + $0x500] sm:$0xff]
                  %677 = vst [vmem:[%s515 + $0x280] sm:$0xff] %v676
                  %v678 = vld [vmem:[%s514 + $0x508] sm:$0xff]
                  %679 = vst [vmem:[%s515 + $0x288] sm:$0xff] %v678
                  %v680 = vld [vmem:[%s514 + $0x510] sm:$0xff]
                  %681 = vst [vmem:[%s515 + $0x290] sm:$0xff] %v680
                  %v682 = vld [vmem:[%s514 + $0x518] sm:$0xff]
                  %683 = vst [vmem:[%s515 + $0x298] sm:$0xff] %v682
                  %v684 = vld [vmem:[%s514 + $0x520] sm:$0xff]
                  %685 = vst [vmem:[%s515 + $0x2a0] sm:$0xff] %v684
                  %v686 = vld [vmem:[%s514 + $0x528] sm:$0xff]
                  %687 = vst [vmem:[%s515 + $0x2a8] sm:$0xff] %v686
                  %v688 = vld [vmem:[%s514 + $0x530] sm:$0xff]
                  %689 = vst [vmem:[%s515 + $0x2b0] sm:$0xff] %v688
                  %v690 = vld [vmem:[%s514 + $0x538] sm:$0xff]
                  %691 = vst [vmem:[%s515 + $0x2b8] sm:$0xff] %v690
                  %v692 = vld [vmem:[%s514 + $0x540] sm:$0xff]
                  %693 = vst [vmem:[%s515 + $0x2c0] sm:$0xff] %v692
                  %v694 = vld [vmem:[%s514 + $0x548] sm:$0xff]
                  %695 = vst [vmem:[%s515 + $0x2c8] sm:$0xff] %v694
                  %v696 = vld [vmem:[%s514 + $0x550] sm:$0xff]
                  %697 = vst [vmem:[%s515 + $0x2d0] sm:$0xff] %v696
                  %v698 = vld [vmem:[%s514 + $0x558] sm:$0xff]
                  %699 = vst [vmem:[%s515 + $0x2d8] sm:$0xff] %v698
                  %v700 = vld [vmem:[%s514 + $0x560] sm:$0xff]
                  %701 = vst [vmem:[%s515 + $0x2e0] sm:$0xff] %v700
                  %v702 = vld [vmem:[%s514 + $0x568] sm:$0xff]
                  %703 = vst [vmem:[%s515 + $0x2e8] sm:$0xff] %v702
                  %v704 = vld [vmem:[%s514 + $0x570] sm:$0xff]
                  %705 = vst [vmem:[%s515 + $0x2f0] sm:$0xff] %v704
                  %v706 = vld [vmem:[%s514 + $0x578] sm:$0xff]
                  %707 = vst [vmem:[%s515 + $0x2f8] sm:$0xff] %v706
                  %v708 = vld [vmem:[%s514 + $0x600] sm:$0xff]
                  %709 = vst [vmem:[%s515 + $0x300] sm:$0xff] %v708
                  %v710 = vld [vmem:[%s514 + $0x608] sm:$0xff]
                  %711 = vst [vmem:[%s515 + $0x308] sm:$0xff] %v710
                  %v712 = vld [vmem:[%s514 + $0x610] sm:$0xff]
                  %713 = vst [vmem:[%s515 + $0x310] sm:$0xff] %v712
                  %v714 = vld [vmem:[%s514 + $0x618] sm:$0xff]
                  %715 = vst [vmem:[%s515 + $0x318] sm:$0xff] %v714
                  %v716 = vld [vmem:[%s514 + $0x620] sm:$0xff]
                  %717 = vst [vmem:[%s515 + $0x320] sm:$0xff] %v716
                  %v718 = vld [vmem:[%s514 + $0x628] sm:$0xff]
                  %719 = vst [vmem:[%s515 + $0x328] sm:$0xff] %v718
                  %v720 = vld [vmem:[%s514 + $0x630] sm:$0xff]
                  %721 = vst [vmem:[%s515 + $0x330] sm:$0xff] %v720
                  %v722 = vld [vmem:[%s514 + $0x638] sm:$0xff]
                  %723 = vst [vmem:[%s515 + $0x338] sm:$0xff] %v722
                  %v724 = vld [vmem:[%s514 + $0x640] sm:$0xff]
                  %725 = vst [vmem:[%s515 + $0x340] sm:$0xff] %v724
                  %v726 = vld [vmem:[%s514 + $0x648] sm:$0xff]
                  %727 = vst [vmem:[%s515 + $0x348] sm:$0xff] %v726
                  %v728 = vld [vmem:[%s514 + $0x650] sm:$0xff]
                  %729 = vst [vmem:[%s515 + $0x350] sm:$0xff] %v728
                  %v730 = vld [vmem:[%s514 + $0x658] sm:$0xff]
                  %731 = vst [vmem:[%s515 + $0x358] sm:$0xff] %v730
                  %v732 = vld [vmem:[%s514 + $0x660] sm:$0xff]
                  %733 = vst [vmem:[%s515 + $0x360] sm:$0xff] %v732
                  %v734 = vld [vmem:[%s514 + $0x668] sm:$0xff]
                  %735 = vst [vmem:[%s515 + $0x368] sm:$0xff] %v734
                  %v736 = vld [vmem:[%s514 + $0x670] sm:$0xff]
                  %737 = vst [vmem:[%s515 + $0x370] sm:$0xff] %v736
                  %v738 = vld [vmem:[%s514 + $0x678] sm:$0xff]
                  %739 = vst [vmem:[%s515 + $0x378] sm:$0xff] %v738
                  %v740 = vld [vmem:[%s514 + $0x700] sm:$0xff]
                  %741 = vst [vmem:[%s515 + $0x380] sm:$0xff] %v740
                  %v742 = vld [vmem:[%s514 + $0x708] sm:$0xff]
                  %743 = vst [vmem:[%s515 + $0x388] sm:$0xff] %v742
                  %v744 = vld [vmem:[%s514 + $0x710] sm:$0xff]
                  %745 = vst [vmem:[%s515 + $0x390] sm:$0xff] %v744
                  %v746 = vld [vmem:[%s514 + $0x718] sm:$0xff]
                  %747 = vst [vmem:[%s515 + $0x398] sm:$0xff] %v746
                  %v748 = vld [vmem:[%s514 + $0x720] sm:$0xff]
                  %749 = vst [vmem:[%s515 + $0x3a0] sm:$0xff] %v748
                  %v750 = vld [vmem:[%s514 + $0x728] sm:$0xff]
                  %751 = vst [vmem:[%s515 + $0x3a8] sm:$0xff] %v750
                  %v752 = vld [vmem:[%s514 + $0x730] sm:$0xff]
                  %753 = vst [vmem:[%s515 + $0x3b0] sm:$0xff] %v752
                  %v754 = vld [vmem:[%s514 + $0x738] sm:$0xff]
                  %755 = vst [vmem:[%s515 + $0x3b8] sm:$0xff] %v754
                  %v756 = vld [vmem:[%s514 + $0x740] sm:$0xff]
                  %757 = vst [vmem:[%s515 + $0x3c0] sm:$0xff] %v756
                  %v758 = vld [vmem:[%s514 + $0x748] sm:$0xff]
                  %759 = vst [vmem:[%s515 + $0x3c8] sm:$0xff] %v758
                  %v760 = vld [vmem:[%s514 + $0x750] sm:$0xff]
                  %761 = vst [vmem:[%s515 + $0x3d0] sm:$0xff] %v760
                  %v762 = vld [vmem:[%s514 + $0x758] sm:$0xff]
                  %763 = vst [vmem:[%s515 + $0x3d8] sm:$0xff] %v762
                  %v764 = vld [vmem:[%s514 + $0x760] sm:$0xff]
                  %765 = vst [vmem:[%s515 + $0x3e0] sm:$0xff] %v764
                  %v766 = vld [vmem:[%s514 + $0x768] sm:$0xff]
                  %767 = vst [vmem:[%s515 + $0x3e8] sm:$0xff] %v766
                  %v768 = vld [vmem:[%s514 + $0x770] sm:$0xff]
                  %769 = vst [vmem:[%s515 + $0x3f0] sm:$0xff] %v768
                  %v770 = vld [vmem:[%s514 + $0x778] sm:$0xff]
                  %771 = vst [vmem:[%s515 + $0x3f8] sm:$0xff] %v770
                $region64: #{tpu_custom_call.1} parent=58 // loop_footer
                  %s513 = sadd.s32 1, %s509
                $region65: #{tpu_custom_call.1} parent=58 // loop_footer_branch
                  %508 = sbr.rel target = $region61
                $region66: #{tpu_custom_call.1} parent=58 // loop_exit
                  _
              $region59: #{tpu_custom_call.1} parent=43 // pred_fallthru
                _
              // Predicated region
              $region67: #{tpu_custom_call.1} parent=43 // pred_check
                _
              $region68: #{tpu_custom_call.1} parent=43 // pred_check_branch
                %773 = sbr.rel target = $region70
              $region69: #{tpu_custom_call.1} parent=43 // pred_region
                _
              $region70: #{tpu_custom_call.1} parent=43 // pred_fallthru
                _
            $region44: #{tpu_custom_call.1} parent=39 // pred_fallthru
              _
            // Predicated region
            $region45: #{tpu_custom_call.1} parent=39 // pred_check
              _
            $region46: #{tpu_custom_call.1} parent=39 // pred_check_branch
              %240 = sbr.rel target = $region48
            $region47: #{tpu_custom_call.1} parent=39 // pred_region
              loop: start=0, step=1, limit=1
              $region49: #{tpu_custom_call.1} parent=47 // loop_pre_header
                _
              $region50: #{tpu_custom_call.1} parent=47 // loop_header
                %s243 = sphi 0, %s247
                %p244 = scmp.ge.s32.totalorder %s243, 1
                %s248 = sphi %s234, %s234
                %s249 = sphi %s228, %s228
              $region51: #{tpu_custom_call.1} parent=47 // loop_header_branch
                %246 = sbr.rel (%p244) target = $region55
              $region52: #{tpu_custom_call.1} parent=47 // loop_body
                %v250 = vld [vmem:[%s248] sm:$0xff]
                %251 = vst [vmem:[%s249] sm:$0xff] %v250
                %v252 = vld [vmem:[%s248 + $0x8] sm:$0xff]
                %253 = vst [vmem:[%s249 + $0x8] sm:$0xff] %v252
                %v254 = vld [vmem:[%s248 + $0x10] sm:$0xff]
                %255 = vst [vmem:[%s249 + $0x10] sm:$0xff] %v254
                %v256 = vld [vmem:[%s248 + $0x18] sm:$0xff]
                %257 = vst [vmem:[%s249 + $0x18] sm:$0xff] %v256
                %v258 = vld [vmem:[%s248 + $0x20] sm:$0xff]
                %259 = vst [vmem:[%s249 + $0x20] sm:$0xff] %v258
                %v260 = vld [vmem:[%s248 + $0x28] sm:$0xff]
                %261 = vst [vmem:[%s249 + $0x28] sm:$0xff] %v260
                %v262 = vld [vmem:[%s248 + $0x30] sm:$0xff]
                %263 = vst [vmem:[%s249 + $0x30] sm:$0xff] %v262
                %v264 = vld [vmem:[%s248 + $0x38] sm:$0xff]
                %265 = vst [vmem:[%s249 + $0x38] sm:$0xff] %v264
                %v266 = vld [vmem:[%s248 + $0x40] sm:$0xff]
                %267 = vst [vmem:[%s249 + $0x40] sm:$0xff] %v266
                %v268 = vld [vmem:[%s248 + $0x48] sm:$0xff]
                %269 = vst [vmem:[%s249 + $0x48] sm:$0xff] %v268
                %v270 = vld [vmem:[%s248 + $0x50] sm:$0xff]
                %271 = vst [vmem:[%s249 + $0x50] sm:$0xff] %v270
                %v272 = vld [vmem:[%s248 + $0x58] sm:$0xff]
                %273 = vst [vmem:[%s249 + $0x58] sm:$0xff] %v272
                %v274 = vld [vmem:[%s248 + $0x60] sm:$0xff]
                %275 = vst [vmem:[%s249 + $0x60] sm:$0xff] %v274
                %v276 = vld [vmem:[%s248 + $0x68] sm:$0xff]
                %277 = vst [vmem:[%s249 + $0x68] sm:$0xff] %v276
                %v278 = vld [vmem:[%s248 + $0x70] sm:$0xff]
                %279 = vst [vmem:[%s249 + $0x70] sm:$0xff] %v278
                %v280 = vld [vmem:[%s248 + $0x78] sm:$0xff]
                %281 = vst [vmem:[%s249 + $0x78] sm:$0xff] %v280
                %v282 = vld [vmem:[%s248 + $0x100] sm:$0xff]
                %283 = vst [vmem:[%s249 + $0x80] sm:$0xff] %v282
                %v284 = vld [vmem:[%s248 + $0x108] sm:$0xff]
                %285 = vst [vmem:[%s249 + $0x88] sm:$0xff] %v284
                %v286 = vld [vmem:[%s248 + $0x110] sm:$0xff]
                %287 = vst [vmem:[%s249 + $0x90] sm:$0xff] %v286
                %v288 = vld [vmem:[%s248 + $0x118] sm:$0xff]
                %289 = vst [vmem:[%s249 + $0x98] sm:$0xff] %v288
                %v290 = vld [vmem:[%s248 + $0x120] sm:$0xff]
                %291 = vst [vmem:[%s249 + $0xa0] sm:$0xff] %v290
                %v292 = vld [vmem:[%s248 + $0x128] sm:$0xff]
                %293 = vst [vmem:[%s249 + $0xa8] sm:$0xff] %v292
                %v294 = vld [vmem:[%s248 + $0x130] sm:$0xff]
                %295 = vst [vmem:[%s249 + $0xb0] sm:$0xff] %v294
                %v296 = vld [vmem:[%s248 + $0x138] sm:$0xff]
                %297 = vst [vmem:[%s249 + $0xb8] sm:$0xff] %v296
                %v298 = vld [vmem:[%s248 + $0x140] sm:$0xff]
                %299 = vst [vmem:[%s249 + $0xc0] sm:$0xff] %v298
                %v300 = vld [vmem:[%s248 + $0x148] sm:$0xff]
                %301 = vst [vmem:[%s249 + $0xc8] sm:$0xff] %v300
                %v302 = vld [vmem:[%s248 + $0x150] sm:$0xff]
                %303 = vst [vmem:[%s249 + $0xd0] sm:$0xff] %v302
                %v304 = vld [vmem:[%s248 + $0x158] sm:$0xff]
                %305 = vst [vmem:[%s249 + $0xd8] sm:$0xff] %v304
                %v306 = vld [vmem:[%s248 + $0x160] sm:$0xff]
                %307 = vst [vmem:[%s249 + $0xe0] sm:$0xff] %v306
                %v308 = vld [vmem:[%s248 + $0x168] sm:$0xff]
                %309 = vst [vmem:[%s249 + $0xe8] sm:$0xff] %v308
                %v310 = vld [vmem:[%s248 + $0x170] sm:$0xff]
                %311 = vst [vmem:[%s249 + $0xf0] sm:$0xff] %v310
                %v312 = vld [vmem:[%s248 + $0x178] sm:$0xff]
                %313 = vst [vmem:[%s249 + $0xf8] sm:$0xff] %v312
                %v314 = vld [vmem:[%s248 + $0x200] sm:$0xff]
                %315 = vst [vmem:[%s249 + $0x100] sm:$0xff] %v314
                %v316 = vld [vmem:[%s248 + $0x208] sm:$0xff]
                %317 = vst [vmem:[%s249 + $0x108] sm:$0xff] %v316
                %v318 = vld [vmem:[%s248 + $0x210] sm:$0xff]
                %319 = vst [vmem:[%s249 + $0x110] sm:$0xff] %v318
                %v320 = vld [vmem:[%s248 + $0x218] sm:$0xff]
                %321 = vst [vmem:[%s249 + $0x118] sm:$0xff] %v320
                %v322 = vld [vmem:[%s248 + $0x220] sm:$0xff]
                %323 = vst [vmem:[%s249 + $0x120] sm:$0xff] %v322
                %v324 = vld [vmem:[%s248 + $0x228] sm:$0xff]
                %325 = vst [vmem:[%s249 + $0x128] sm:$0xff] %v324
                %v326 = vld [vmem:[%s248 + $0x230] sm:$0xff]
                %327 = vst [vmem:[%s249 + $0x130] sm:$0xff] %v326
                %v328 = vld [vmem:[%s248 + $0x238] sm:$0xff]
                %329 = vst [vmem:[%s249 + $0x138] sm:$0xff] %v328
                %v330 = vld [vmem:[%s248 + $0x240] sm:$0xff]
                %331 = vst [vmem:[%s249 + $0x140] sm:$0xff] %v330
                %v332 = vld [vmem:[%s248 + $0x248] sm:$0xff]
                %333 = vst [vmem:[%s249 + $0x148] sm:$0xff] %v332
                %v334 = vld [vmem:[%s248 + $0x250] sm:$0xff]
                %335 = vst [vmem:[%s249 + $0x150] sm:$0xff] %v334
                %v336 = vld [vmem:[%s248 + $0x258] sm:$0xff]
                %337 = vst [vmem:[%s249 + $0x158] sm:$0xff] %v336
                %v338 = vld [vmem:[%s248 + $0x260] sm:$0xff]
                %339 = vst [vmem:[%s249 + $0x160] sm:$0xff] %v338
                %v340 = vld [vmem:[%s248 + $0x268] sm:$0xff]
                %341 = vst [vmem:[%s249 + $0x168] sm:$0xff] %v340
                %v342 = vld [vmem:[%s248 + $0x270] sm:$0xff]
                %343 = vst [vmem:[%s249 + $0x170] sm:$0xff] %v342
                %v344 = vld [vmem:[%s248 + $0x278] sm:$0xff]
                %345 = vst [vmem:[%s249 + $0x178] sm:$0xff] %v344
                %v346 = vld [vmem:[%s248 + $0x300] sm:$0xff]
                %347 = vst [vmem:[%s249 + $0x180] sm:$0xff] %v346
                %v348 = vld [vmem:[%s248 + $0x308] sm:$0xff]
                %349 = vst [vmem:[%s249 + $0x188] sm:$0xff] %v348
                %v350 = vld [vmem:[%s248 + $0x310] sm:$0xff]
                %351 = vst [vmem:[%s249 + $0x190] sm:$0xff] %v350
                %v352 = vld [vmem:[%s248 + $0x318] sm:$0xff]
                %353 = vst [vmem:[%s249 + $0x198] sm:$0xff] %v352
                %v354 = vld [vmem:[%s248 + $0x320] sm:$0xff]
                %355 = vst [vmem:[%s249 + $0x1a0] sm:$0xff] %v354
                %v356 = vld [vmem:[%s248 + $0x328] sm:$0xff]
                %357 = vst [vmem:[%s249 + $0x1a8] sm:$0xff] %v356
                %v358 = vld [vmem:[%s248 + $0x330] sm:$0xff]
                %359 = vst [vmem:[%s249 + $0x1b0] sm:$0xff] %v358
                %v360 = vld [vmem:[%s248 + $0x338] sm:$0xff]
                %361 = vst [vmem:[%s249 + $0x1b8] sm:$0xff] %v360
                %v362 = vld [vmem:[%s248 + $0x340] sm:$0xff]
                %363 = vst [vmem:[%s249 + $0x1c0] sm:$0xff] %v362
                %v364 = vld [vmem:[%s248 + $0x348] sm:$0xff]
                %365 = vst [vmem:[%s249 + $0x1c8] sm:$0xff] %v364
                %v366 = vld [vmem:[%s248 + $0x350] sm:$0xff]
                %367 = vst [vmem:[%s249 + $0x1d0] sm:$0xff] %v366
                %v368 = vld [vmem:[%s248 + $0x358] sm:$0xff]
                %369 = vst [vmem:[%s249 + $0x1d8] sm:$0xff] %v368
                %v370 = vld [vmem:[%s248 + $0x360] sm:$0xff]
                %371 = vst [vmem:[%s249 + $0x1e0] sm:$0xff] %v370
                %v372 = vld [vmem:[%s248 + $0x368] sm:$0xff]
                %373 = vst [vmem:[%s249 + $0x1e8] sm:$0xff] %v372
                %v374 = vld [vmem:[%s248 + $0x370] sm:$0xff]
                %375 = vst [vmem:[%s249 + $0x1f0] sm:$0xff] %v374
                %v376 = vld [vmem:[%s248 + $0x378] sm:$0xff]
                %377 = vst [vmem:[%s249 + $0x1f8] sm:$0xff] %v376
                %v378 = vld [vmem:[%s248 + $0x400] sm:$0xff]
                %379 = vst [vmem:[%s249 + $0x200] sm:$0xff] %v378
                %v380 = vld [vmem:[%s248 + $0x408] sm:$0xff]
                %381 = vst [vmem:[%s249 + $0x208] sm:$0xff] %v380
                %v382 = vld [vmem:[%s248 + $0x410] sm:$0xff]
                %383 = vst [vmem:[%s249 + $0x210] sm:$0xff] %v382
                %v384 = vld [vmem:[%s248 + $0x418] sm:$0xff]
                %385 = vst [vmem:[%s249 + $0x218] sm:$0xff] %v384
                %v386 = vld [vmem:[%s248 + $0x420] sm:$0xff]
                %387 = vst [vmem:[%s249 + $0x220] sm:$0xff] %v386
                %v388 = vld [vmem:[%s248 + $0x428] sm:$0xff]
                %389 = vst [vmem:[%s249 + $0x228] sm:$0xff] %v388
                %v390 = vld [vmem:[%s248 + $0x430] sm:$0xff]
                %391 = vst [vmem:[%s249 + $0x230] sm:$0xff] %v390
                %v392 = vld [vmem:[%s248 + $0x438] sm:$0xff]
                %393 = vst [vmem:[%s249 + $0x238] sm:$0xff] %v392
                %v394 = vld [vmem:[%s248 + $0x440] sm:$0xff]
                %395 = vst [vmem:[%s249 + $0x240] sm:$0xff] %v394
                %v396 = vld [vmem:[%s248 + $0x448] sm:$0xff]
                %397 = vst [vmem:[%s249 + $0x248] sm:$0xff] %v396
                %v398 = vld [vmem:[%s248 + $0x450] sm:$0xff]
                %399 = vst [vmem:[%s249 + $0x250] sm:$0xff] %v398
                %v400 = vld [vmem:[%s248 + $0x458] sm:$0xff]
                %401 = vst [vmem:[%s249 + $0x258] sm:$0xff] %v400
                %v402 = vld [vmem:[%s248 + $0x460] sm:$0xff]
                %403 = vst [vmem:[%s249 + $0x260] sm:$0xff] %v402
                %v404 = vld [vmem:[%s248 + $0x468] sm:$0xff]
                %405 = vst [vmem:[%s249 + $0x268] sm:$0xff] %v404
                %v406 = vld [vmem:[%s248 + $0x470] sm:$0xff]
                %407 = vst [vmem:[%s249 + $0x270] sm:$0xff] %v406
                %v408 = vld [vmem:[%s248 + $0x478] sm:$0xff]
                %409 = vst [vmem:[%s249 + $0x278] sm:$0xff] %v408
                %v410 = vld [vmem:[%s248 + $0x500] sm:$0xff]
                %411 = vst [vmem:[%s249 + $0x280] sm:$0xff] %v410
                %v412 = vld [vmem:[%s248 + $0x508] sm:$0xff]
                %413 = vst [vmem:[%s249 + $0x288] sm:$0xff] %v412
                %v414 = vld [vmem:[%s248 + $0x510] sm:$0xff]
                %415 = vst [vmem:[%s249 + $0x290] sm:$0xff] %v414
                %v416 = vld [vmem:[%s248 + $0x518] sm:$0xff]
                %417 = vst [vmem:[%s249 + $0x298] sm:$0xff] %v416
                %v418 = vld [vmem:[%s248 + $0x520] sm:$0xff]
                %419 = vst [vmem:[%s249 + $0x2a0] sm:$0xff] %v418
                %v420 = vld [vmem:[%s248 + $0x528] sm:$0xff]
                %421 = vst [vmem:[%s249 + $0x2a8] sm:$0xff] %v420
                %v422 = vld [vmem:[%s248 + $0x530] sm:$0xff]
                %423 = vst [vmem:[%s249 + $0x2b0] sm:$0xff] %v422
                %v424 = vld [vmem:[%s248 + $0x538] sm:$0xff]
                %425 = vst [vmem:[%s249 + $0x2b8] sm:$0xff] %v424
                %v426 = vld [vmem:[%s248 + $0x540] sm:$0xff]
                %427 = vst [vmem:[%s249 + $0x2c0] sm:$0xff] %v426
                %v428 = vld [vmem:[%s248 + $0x548] sm:$0xff]
                %429 = vst [vmem:[%s249 + $0x2c8] sm:$0xff] %v428
                %v430 = vld [vmem:[%s248 + $0x550] sm:$0xff]
                %431 = vst [vmem:[%s249 + $0x2d0] sm:$0xff] %v430
                %v432 = vld [vmem:[%s248 + $0x558] sm:$0xff]
                %433 = vst [vmem:[%s249 + $0x2d8] sm:$0xff] %v432
                %v434 = vld [vmem:[%s248 + $0x560] sm:$0xff]
                %435 = vst [vmem:[%s249 + $0x2e0] sm:$0xff] %v434
                %v436 = vld [vmem:[%s248 + $0x568] sm:$0xff]
                %437 = vst [vmem:[%s249 + $0x2e8] sm:$0xff] %v436
                %v438 = vld [vmem:[%s248 + $0x570] sm:$0xff]
                %439 = vst [vmem:[%s249 + $0x2f0] sm:$0xff] %v438
                %v440 = vld [vmem:[%s248 + $0x578] sm:$0xff]
                %441 = vst [vmem:[%s249 + $0x2f8] sm:$0xff] %v440
                %v442 = vld [vmem:[%s248 + $0x600] sm:$0xff]
                %443 = vst [vmem:[%s249 + $0x300] sm:$0xff] %v442
                %v444 = vld [vmem:[%s248 + $0x608] sm:$0xff]
                %445 = vst [vmem:[%s249 + $0x308] sm:$0xff] %v444
                %v446 = vld [vmem:[%s248 + $0x610] sm:$0xff]
                %447 = vst [vmem:[%s249 + $0x310] sm:$0xff] %v446
                %v448 = vld [vmem:[%s248 + $0x618] sm:$0xff]
                %449 = vst [vmem:[%s249 + $0x318] sm:$0xff] %v448
                %v450 = vld [vmem:[%s248 + $0x620] sm:$0xff]
                %451 = vst [vmem:[%s249 + $0x320] sm:$0xff] %v450
                %v452 = vld [vmem:[%s248 + $0x628] sm:$0xff]
                %453 = vst [vmem:[%s249 + $0x328] sm:$0xff] %v452
                %v454 = vld [vmem:[%s248 + $0x630] sm:$0xff]
                %455 = vst [vmem:[%s249 + $0x330] sm:$0xff] %v454
                %v456 = vld [vmem:[%s248 + $0x638] sm:$0xff]
                %457 = vst [vmem:[%s249 + $0x338] sm:$0xff] %v456
                %v458 = vld [vmem:[%s248 + $0x640] sm:$0xff]
                %459 = vst [vmem:[%s249 + $0x340] sm:$0xff] %v458
                %v460 = vld [vmem:[%s248 + $0x648] sm:$0xff]
                %461 = vst [vmem:[%s249 + $0x348] sm:$0xff] %v460
                %v462 = vld [vmem:[%s248 + $0x650] sm:$0xff]
                %463 = vst [vmem:[%s249 + $0x350] sm:$0xff] %v462
                %v464 = vld [vmem:[%s248 + $0x658] sm:$0xff]
                %465 = vst [vmem:[%s249 + $0x358] sm:$0xff] %v464
                %v466 = vld [vmem:[%s248 + $0x660] sm:$0xff]
                %467 = vst [vmem:[%s249 + $0x360] sm:$0xff] %v466
                %v468 = vld [vmem:[%s248 + $0x668] sm:$0xff]
                %469 = vst [vmem:[%s249 + $0x368] sm:$0xff] %v468
                %v470 = vld [vmem:[%s248 + $0x670] sm:$0xff]
                %471 = vst [vmem:[%s249 + $0x370] sm:$0xff] %v470
                %v472 = vld [vmem:[%s248 + $0x678] sm:$0xff]
                %473 = vst [vmem:[%s249 + $0x378] sm:$0xff] %v472
                %v474 = vld [vmem:[%s248 + $0x700] sm:$0xff]
                %475 = vst [vmem:[%s249 + $0x380] sm:$0xff] %v474
                %v476 = vld [vmem:[%s248 + $0x708] sm:$0xff]
                %477 = vst [vmem:[%s249 + $0x388] sm:$0xff] %v476
                %v478 = vld [vmem:[%s248 + $0x710] sm:$0xff]
                %479 = vst [vmem:[%s249 + $0x390] sm:$0xff] %v478
                %v480 = vld [vmem:[%s248 + $0x718] sm:$0xff]
                %481 = vst [vmem:[%s249 + $0x398] sm:$0xff] %v480
                %v482 = vld [vmem:[%s248 + $0x720] sm:$0xff]
                %483 = vst [vmem:[%s249 + $0x3a0] sm:$0xff] %v482
                %v484 = vld [vmem:[%s248 + $0x728] sm:$0xff]
                %485 = vst [vmem:[%s249 + $0x3a8] sm:$0xff] %v484
                %v486 = vld [vmem:[%s248 + $0x730] sm:$0xff]
                %487 = vst [vmem:[%s249 + $0x3b0] sm:$0xff] %v486
                %v488 = vld [vmem:[%s248 + $0x738] sm:$0xff]
                %489 = vst [vmem:[%s249 + $0x3b8] sm:$0xff] %v488
                %v490 = vld [vmem:[%s248 + $0x740] sm:$0xff]
                %491 = vst [vmem:[%s249 + $0x3c0] sm:$0xff] %v490
                %v492 = vld [vmem:[%s248 + $0x748] sm:$0xff]
                %493 = vst [vmem:[%s249 + $0x3c8] sm:$0xff] %v492
                %v494 = vld [vmem:[%s248 + $0x750] sm:$0xff]
                %495 = vst [vmem:[%s249 + $0x3d0] sm:$0xff] %v494
                %v496 = vld [vmem:[%s248 + $0x758] sm:$0xff]
                %497 = vst [vmem:[%s249 + $0x3d8] sm:$0xff] %v496
                %v498 = vld [vmem:[%s248 + $0x760] sm:$0xff]
                %499 = vst [vmem:[%s249 + $0x3e0] sm:$0xff] %v498
                %v500 = vld [vmem:[%s248 + $0x768] sm:$0xff]
                %501 = vst [vmem:[%s249 + $0x3e8] sm:$0xff] %v500
                %v502 = vld [vmem:[%s248 + $0x770] sm:$0xff]
                %503 = vst [vmem:[%s249 + $0x3f0] sm:$0xff] %v502
                %v504 = vld [vmem:[%s248 + $0x778] sm:$0xff]
                %505 = vst [vmem:[%s249 + $0x3f8] sm:$0xff] %v504
              $region53: #{tpu_custom_call.1} parent=47 // loop_footer
                %s247 = sadd.s32 1, %s243
              $region54: #{tpu_custom_call.1} parent=47 // loop_footer_branch
                %242 = sbr.rel target = $region50
              $region55: #{tpu_custom_call.1} parent=47 // loop_exit
                _
            $region48: #{tpu_custom_call.1} parent=39 // pred_fallthru
              _
          $region40: #{tpu_custom_call.1} parent=35 // pred_fallthru
            _
          %774 = vnop
        $region36: #{tpu_custom_call.1} parent=31 // pred_fallthru
          _
      $region32: #{tpu_custom_call.1} parent=5 // pred_fallthru
        _
      %p775 = scmp.le.s32.totalorder 1, %s15
      %p776 = scmp.lt.s32.totalorder %s15, 3
      %p777 = pnand %p775, %p776
      %p778 = pneg %p777
      // Predicated region
      $region71: #{tpu_custom_call.1} parent=5 // pred_check
        _
      $region72: #{tpu_custom_call.1} parent=5 // pred_check_branch
        %780 = sbr.rel (%p777) target = $region74
      $region73: #{tpu_custom_call.1} parent=5 // pred_region
        %s781 = ssub.s32 %s15, 1
        %s782 = sand.u32 %s42, 1
        %s783 = sand.u32 %s42, 1
        %s784 = smul.addr %s783, 1024
        %s785 = scalar_lea.vmem [#allocation3], %s784
        // Predicated region
        $region75: #{tpu_custom_call.1} parent=73 // pred_check
          %p786 = pneg %p55
        $region76: #{tpu_custom_call.1} parent=73 // pred_check_branch
          %788 = sbr.rel (%p786) target = $region78
        $region77: #{tpu_custom_call.1} parent=73 // pred_region
          _
        $region78: #{tpu_custom_call.1} parent=73 // pred_fallthru
          _
        %s789 = sand.u32 %s42, 1
        %s790 = sand.u32 %s42, 1
        %s791 = smul.addr %s790, 1024
        %s792 = scalar_lea.vmem [#allocation3], %s791
        %p793 = pneg %p55
        %p794 = pneg %p52
        %p795 = pneg %p76
        %p796 = pneg %p73
        %p797 = pneg %p97
        %p798 = pneg %p94
        %p799 = pneg %p118
        %p800 = pneg %p115
        %p801 = pneg %p139
        %p802 = pneg %p136
        %p803 = pneg %p165
        %p804 = pneg %p162
        %p805 = pneg %p191
        %p806 = pneg %p188
        %s807 = smul.u32 8, %s24
        %s808 = smul.u32 16, %s25
        %p809 = scmp.eq.s32.totalorder %s25, 0
        // Predicated region
        $region79: #{tpu_custom_call.1} parent=73 // pred_check
          %p810 = pneg %p809
        $region80: #{tpu_custom_call.1} parent=73 // pred_check_branch
          %812 = sbr.rel (%p810) target = $region82
        $region81: #{tpu_custom_call.1} parent=73 // pred_region
          %vm813 = vcmask 31744
          %814 = vst.msk [vmem:[#allocation2] sm:$0xff] %vm813, 0.0
        $region82: #{tpu_custom_call.1} parent=73 // pred_fallthru
          _
        %v815 = vld [vmem:[%s785] sm:$0xff]
        %v816 = vld [vmem:[%s785 + $0x8] sm:$0xff]
        %v817 = vld [vmem:[%s785 + $0x10] sm:$0xff]
        %v818 = vld [vmem:[%s785 + $0x18] sm:$0xff]
        %v819 = vld [vmem:[%s785 + $0x20] sm:$0xff]
        %v820 = vld [vmem:[%s785 + $0x28] sm:$0xff]
        %v821 = vld [vmem:[%s785 + $0x30] sm:$0xff]
        %v822 = vld [vmem:[%s785 + $0x38] sm:$0xff]
        %v823 = vld [vmem:[%s785 + $0x40] sm:$0xff]
        %v824 = vld [vmem:[%s785 + $0x48] sm:$0xff]
        %v825 = vld [vmem:[%s785 + $0x50] sm:$0xff]
        %v826 = vld [vmem:[%s785 + $0x58] sm:$0xff]
        %v827 = vld [vmem:[%s785 + $0x60] sm:$0xff]
        %v828 = vld [vmem:[%s785 + $0x68] sm:$0xff]
        %v829 = vld [vmem:[%s785 + $0x70] sm:$0xff]
        %v830 = vld [vmem:[%s785 + $0x78] sm:$0xff]
        %v831 = vld [vmem:[%s785 + $0x80] sm:$0xff]
        %v832 = vld [vmem:[%s785 + $0x88] sm:$0xff]
        %v833 = vld [vmem:[%s785 + $0x90] sm:$0xff]
        %v834 = vld [vmem:[%s785 + $0x98] sm:$0xff]
        %v835 = vld [vmem:[%s785 + $0xa0] sm:$0xff]
        %v836 = vld [vmem:[%s785 + $0xa8] sm:$0xff]
        %v837 = vld [vmem:[%s785 + $0xb0] sm:$0xff]
        %v838 = vld [vmem:[%s785 + $0xb8] sm:$0xff]
        %v839 = vld [vmem:[%s785 + $0xc0] sm:$0xff]
        %v840 = vld [vmem:[%s785 + $0xc8] sm:$0xff]
        %v841 = vld [vmem:[%s785 + $0xd0] sm:$0xff]
        %v842 = vld [vmem:[%s785 + $0xd8] sm:$0xff]
        %v843 = vld [vmem:[%s785 + $0xe0] sm:$0xff]
        %v844 = vld [vmem:[%s785 + $0xe8] sm:$0xff]
        %v845 = vld [vmem:[%s785 + $0xf0] sm:$0xff]
        %v846 = vld [vmem:[%s785 + $0xf8] sm:$0xff]
        %v847 = vld [vmem:[%s785 + $0x100] sm:$0xff]
        %v848 = vld [vmem:[%s785 + $0x108] sm:$0xff]
        %v849 = vld [vmem:[%s785 + $0x110] sm:$0xff]
        %v850 = vld [vmem:[%s785 + $0x118] sm:$0xff]
        %v851 = vld [vmem:[%s785 + $0x120] sm:$0xff]
        %v852 = vld [vmem:[%s785 + $0x128] sm:$0xff]
        %v853 = vld [vmem:[%s785 + $0x130] sm:$0xff]
        %v854 = vld [vmem:[%s785 + $0x138] sm:$0xff]
        %v855 = vld [vmem:[%s785 + $0x140] sm:$0xff]
        %v856 = vld [vmem:[%s785 + $0x148] sm:$0xff]
        %v857 = vld [vmem:[%s785 + $0x150] sm:$0xff]
        %v858 = vld [vmem:[%s785 + $0x158] sm:$0xff]
        %v859 = vld [vmem:[%s785 + $0x160] sm:$0xff]
        %v860 = vld [vmem:[%s785 + $0x168] sm:$0xff]
        %v861 = vld [vmem:[%s785 + $0x170] sm:$0xff]
        %v862 = vld [vmem:[%s785 + $0x178] sm:$0xff]
        %v863 = vld [vmem:[%s785 + $0x180] sm:$0xff]
        %v864 = vld [vmem:[%s785 + $0x188] sm:$0xff]
        %v865 = vld [vmem:[%s785 + $0x190] sm:$0xff]
        %v866 = vld [vmem:[%s785 + $0x198] sm:$0xff]
        %v867 = vld [vmem:[%s785 + $0x1a0] sm:$0xff]
        %v868 = vld [vmem:[%s785 + $0x1a8] sm:$0xff]
        %v869 = vld [vmem:[%s785 + $0x1b0] sm:$0xff]
        %v870 = vld [vmem:[%s785 + $0x1b8] sm:$0xff]
        %v871 = vld [vmem:[%s785 + $0x1c0] sm:$0xff]
        %v872 = vld [vmem:[%s785 + $0x1c8] sm:$0xff]
        %v873 = vld [vmem:[%s785 + $0x1d0] sm:$0xff]
        %v874 = vld [vmem:[%s785 + $0x1d8] sm:$0xff]
        %v875 = vld [vmem:[%s785 + $0x1e0] sm:$0xff]
        %v876 = vld [vmem:[%s785 + $0x1e8] sm:$0xff]
        %v877 = vld [vmem:[%s785 + $0x1f0] sm:$0xff]
        %v878 = vld [vmem:[%s785 + $0x1f8] sm:$0xff]
        %v879 = vld [vmem:[%s785 + $0x200] sm:$0xff]
        %v880 = vld [vmem:[%s785 + $0x208] sm:$0xff]
        %v881 = vld [vmem:[%s785 + $0x210] sm:$0xff]
        %v882 = vld [vmem:[%s785 + $0x218] sm:$0xff]
        %v883 = vld [vmem:[%s785 + $0x220] sm:$0xff]
        %v884 = vld [vmem:[%s785 + $0x228] sm:$0xff]
        %v885 = vld [vmem:[%s785 + $0x230] sm:$0xff]
        %v886 = vld [vmem:[%s785 + $0x238] sm:$0xff]
        %v887 = vld [vmem:[%s785 + $0x240] sm:$0xff]
        %v888 = vld [vmem:[%s785 + $0x248] sm:$0xff]
        %v889 = vld [vmem:[%s785 + $0x250] sm:$0xff]
        %v890 = vld [vmem:[%s785 + $0x258] sm:$0xff]
        %v891 = vld [vmem:[%s785 + $0x260] sm:$0xff]
        %v892 = vld [vmem:[%s785 + $0x268] sm:$0xff]
        %v893 = vld [vmem:[%s785 + $0x270] sm:$0xff]
        %v894 = vld [vmem:[%s785 + $0x278] sm:$0xff]
        %v895 = vld [vmem:[%s785 + $0x280] sm:$0xff]
        %v896 = vld [vmem:[%s785 + $0x288] sm:$0xff]
        %v897 = vld [vmem:[%s785 + $0x290] sm:$0xff]
        %v898 = vld [vmem:[%s785 + $0x298] sm:$0xff]
        %v899 = vld [vmem:[%s785 + $0x2a0] sm:$0xff]
        %v900 = vld [vmem:[%s785 + $0x2a8] sm:$0xff]
        %v901 = vld [vmem:[%s785 + $0x2b0] sm:$0xff]
        %v902 = vld [vmem:[%s785 + $0x2b8] sm:$0xff]
        %v903 = vld [vmem:[%s785 + $0x2c0] sm:$0xff]
        %v904 = vld [vmem:[%s785 + $0x2c8] sm:$0xff]
        %v905 = vld [vmem:[%s785 + $0x2d0] sm:$0xff]
        %v906 = vld [vmem:[%s785 + $0x2d8] sm:$0xff]
        %v907 = vld [vmem:[%s785 + $0x2e0] sm:$0xff]
        %v908 = vld [vmem:[%s785 + $0x2e8] sm:$0xff]
        %v909 = vld [vmem:[%s785 + $0x2f0] sm:$0xff]
        %v910 = vld [vmem:[%s785 + $0x2f8] sm:$0xff]
        %v911 = vld [vmem:[%s785 + $0x300] sm:$0xff]
        %v912 = vld [vmem:[%s785 + $0x308] sm:$0xff]
        %v913 = vld [vmem:[%s785 + $0x310] sm:$0xff]
        %v914 = vld [vmem:[%s785 + $0x318] sm:$0xff]
        %v915 = vld [vmem:[%s785 + $0x320] sm:$0xff]
        %v916 = vld [vmem:[%s785 + $0x328] sm:$0xff]
        %v917 = vld [vmem:[%s785 + $0x330] sm:$0xff]
        %v918 = vld [vmem:[%s785 + $0x338] sm:$0xff]
        %v919 = vld [vmem:[%s785 + $0x340] sm:$0xff]
        %v920 = vld [vmem:[%s785 + $0x348] sm:$0xff]
        %v921 = vld [vmem:[%s785 + $0x350] sm:$0xff]
        %v922 = vld [vmem:[%s785 + $0x358] sm:$0xff]
        %v923 = vld [vmem:[%s785 + $0x360] sm:$0xff]
        %v924 = vld [vmem:[%s785 + $0x368] sm:$0xff]
        %v925 = vld [vmem:[%s785 + $0x370] sm:$0xff]
        %v926 = vld [vmem:[%s785 + $0x378] sm:$0xff]
        %v927 = vld [vmem:[%s785 + $0x380] sm:$0xff]
        %v928 = vld [vmem:[%s785 + $0x388] sm:$0xff]
        %v929 = vld [vmem:[%s785 + $0x390] sm:$0xff]
        %v930 = vld [vmem:[%s785 + $0x398] sm:$0xff]
        %v931 = vld [vmem:[%s785 + $0x3a0] sm:$0xff]
        %v932 = vld [vmem:[%s785 + $0x3a8] sm:$0xff]
        %v933 = vld [vmem:[%s785 + $0x3b0] sm:$0xff]
        %v934 = vld [vmem:[%s785 + $0x3b8] sm:$0xff]
        %v935 = vld [vmem:[%s785 + $0x3c0] sm:$0xff]
        %v936 = vld [vmem:[%s785 + $0x3c8] sm:$0xff]
        %v937 = vld [vmem:[%s785 + $0x3d0] sm:$0xff]
        %v938 = vld [vmem:[%s785 + $0x3d8] sm:$0xff]
        %v939 = vld [vmem:[%s785 + $0x3e0] sm:$0xff]
        %v940 = vld [vmem:[%s785 + $0x3e8] sm:$0xff]
        %v941 = vld [vmem:[%s785 + $0x3f0] sm:$0xff]
        %v942 = vld [vmem:[%s785 + $0x3f8] sm:$0xff]
        %v943 = vld [vmem:[#allocation2] sm:$0xff]
        %vm944 = vcmask 31744
        %v945 = vsel %vm944, %v815, 0.0
        %v946 = vsel %vm944, %v816, 0.0
        %v947 = vadd.f32 %v945, %v946
        %v948 = vsel %vm944, %v817, 0.0
        %v949 = vadd.f32 %v947, %v948
        %v950 = vsel %vm944, %v818, 0.0
        %v951 = vadd.f32 %v949, %v950
        %v952 = vsel %vm944, %v819, 0.0
        %v953 = vadd.f32 %v951, %v952
        %v954 = vsel %vm944, %v820, 0.0
        %v955 = vadd.f32 %v953, %v954
        %v956 = vsel %vm944, %v821, 0.0
        %v957 = vadd.f32 %v955, %v956
        %v958 = vsel %vm944, %v822, 0.0
        %v959 = vadd.f32 %v957, %v958
        %v960 = vsel %vm944, %v823, 0.0
        %v961 = vadd.f32 %v959, %v960
        %v962 = vsel %vm944, %v824, 0.0
        %v963 = vadd.f32 %v961, %v962
        %v964 = vsel %vm944, %v825, 0.0
        %v965 = vadd.f32 %v963, %v964
        %v966 = vsel %vm944, %v826, 0.0
        %v967 = vadd.f32 %v965, %v966
        %v968 = vsel %vm944, %v827, 0.0
        %v969 = vadd.f32 %v967, %v968
        %v970 = vsel %vm944, %v828, 0.0
        %v971 = vadd.f32 %v969, %v970
        %v972 = vsel %vm944, %v829, 0.0
        %v973 = vadd.f32 %v971, %v972
        %v974 = vsel %vm944, %v830, 0.0
        %v975 = vadd.f32 %v973, %v974
        %v976 = vrot.slane %v975, 4
        %v977 = vadd.f32 %v975, %v976
        %v978 = vrot.slane %v977, 2
        %v979 = vadd.f32 %v977, %v978
        %v980 = vrot.slane %v979, 1
        %v981 = vadd.f32 %v979, %v980
        %v982 = vsel %vm944, %v831, 0.0
        %v983 = vsel %vm944, %v832, 0.0
        %v984 = vadd.f32 %v982, %v983
        %v985 = vsel %vm944, %v833, 0.0
        %v986 = vadd.f32 %v984, %v985
        %v987 = vsel %vm944, %v834, 0.0
        %v988 = vadd.f32 %v986, %v987
        %v989 = vsel %vm944, %v835, 0.0
        %v990 = vadd.f32 %v988, %v989
        %v991 = vsel %vm944, %v836, 0.0
        %v992 = vadd.f32 %v990, %v991
        %v993 = vsel %vm944, %v837, 0.0
        %v994 = vadd.f32 %v992, %v993
        %v995 = vsel %vm944, %v838, 0.0
        %v996 = vadd.f32 %v994, %v995
        %v997 = vsel %vm944, %v839, 0.0
        %v998 = vadd.f32 %v996, %v997
        %v999 = vsel %vm944, %v840, 0.0
        %v1000 = vadd.f32 %v998, %v999
        %v1001 = vsel %vm944, %v841, 0.0
        %v1002 = vadd.f32 %v1000, %v1001
        %v1003 = vsel %vm944, %v842, 0.0
        %v1004 = vadd.f32 %v1002, %v1003
        %v1005 = vsel %vm944, %v843, 0.0
        %v1006 = vadd.f32 %v1004, %v1005
        %v1007 = vsel %vm944, %v844, 0.0
        %v1008 = vadd.f32 %v1006, %v1007
        %v1009 = vsel %vm944, %v845, 0.0
        %v1010 = vadd.f32 %v1008, %v1009
        %v1011 = vsel %vm944, %v846, 0.0
        %v1012 = vadd.f32 %v1010, %v1011
        %v1013 = vrot.slane %v1012, 4
        %v1014 = vadd.f32 %v1012, %v1013
        %v1015 = vrot.slane %v1014, 2
        %v1016 = vadd.f32 %v1014, %v1015
        %v1017 = vrot.slane %v1016, 1
        %v1018 = vadd.f32 %v1016, %v1017
        %v1019 = vsel %vm944, %v847, 0.0
        %v1020 = vsel %vm944, %v848, 0.0
        %v1021 = vadd.f32 %v1019, %v1020
        %v1022 = vsel %vm944, %v849, 0.0
        %v1023 = vadd.f32 %v1021, %v1022
        %v1024 = vsel %vm944, %v850, 0.0
        %v1025 = vadd.f32 %v1023, %v1024
        %v1026 = vsel %vm944, %v851, 0.0
        %v1027 = vadd.f32 %v1025, %v1026
        %v1028 = vsel %vm944, %v852, 0.0
        %v1029 = vadd.f32 %v1027, %v1028
        %v1030 = vsel %vm944, %v853, 0.0
        %v1031 = vadd.f32 %v1029, %v1030
        %v1032 = vsel %vm944, %v854, 0.0
        %v1033 = vadd.f32 %v1031, %v1032
        %v1034 = vsel %vm944, %v855, 0.0
        %v1035 = vadd.f32 %v1033, %v1034
        %v1036 = vsel %vm944, %v856, 0.0
        %v1037 = vadd.f32 %v1035, %v1036
        %v1038 = vsel %vm944, %v857, 0.0
        %v1039 = vadd.f32 %v1037, %v1038
        %v1040 = vsel %vm944, %v858, 0.0
        %v1041 = vadd.f32 %v1039, %v1040
        %v1042 = vsel %vm944, %v859, 0.0
        %v1043 = vadd.f32 %v1041, %v1042
        %v1044 = vsel %vm944, %v860, 0.0
        %v1045 = vadd.f32 %v1043, %v1044
        %v1046 = vsel %vm944, %v861, 0.0
        %v1047 = vadd.f32 %v1045, %v1046
        %v1048 = vsel %vm944, %v862, 0.0
        %v1049 = vadd.f32 %v1047, %v1048
        %v1050 = vrot.slane %v1049, 4
        %v1051 = vadd.f32 %v1049, %v1050
        %v1052 = vrot.slane %v1051, 2
        %v1053 = vadd.f32 %v1051, %v1052
        %v1054 = vrot.slane %v1053, 1
        %v1055 = vadd.f32 %v1053, %v1054
        %v1056 = vsel %vm944, %v863, 0.0
        %v1057 = vsel %vm944, %v864, 0.0
        %v1058 = vadd.f32 %v1056, %v1057
        %v1059 = vsel %vm944, %v865, 0.0
        %v1060 = vadd.f32 %v1058, %v1059
        %v1061 = vsel %vm944, %v866, 0.0
        %v1062 = vadd.f32 %v1060, %v1061
        %v1063 = vsel %vm944, %v867, 0.0
        %v1064 = vadd.f32 %v1062, %v1063
        %v1065 = vsel %vm944, %v868, 0.0
        %v1066 = vadd.f32 %v1064, %v1065
        %v1067 = vsel %vm944, %v869, 0.0
        %v1068 = vadd.f32 %v1066, %v1067
        %v1069 = vsel %vm944, %v870, 0.0
        %v1070 = vadd.f32 %v1068, %v1069
        %v1071 = vsel %vm944, %v871, 0.0
        %v1072 = vadd.f32 %v1070, %v1071
        %v1073 = vsel %vm944, %v872, 0.0
        %v1074 = vadd.f32 %v1072, %v1073
        %v1075 = vsel %vm944, %v873, 0.0
        %v1076 = vadd.f32 %v1074, %v1075
        %v1077 = vsel %vm944, %v874, 0.0
        %v1078 = vadd.f32 %v1076, %v1077
        %v1079 = vsel %vm944, %v875, 0.0
        %v1080 = vadd.f32 %v1078, %v1079
        %v1081 = vsel %vm944, %v876, 0.0
        %v1082 = vadd.f32 %v1080, %v1081
        %v1083 = vsel %vm944, %v877, 0.0
        %v1084 = vadd.f32 %v1082, %v1083
        %v1085 = vsel %vm944, %v878, 0.0
        %v1086 = vadd.f32 %v1084, %v1085
        %v1087 = vrot.slane %v1086, 4
        %v1088 = vadd.f32 %v1086, %v1087
        %v1089 = vrot.slane %v1088, 2
        %v1090 = vadd.f32 %v1088, %v1089
        %v1091 = vrot.slane %v1090, 1
        %v1092 = vadd.f32 %v1090, %v1091
        %v1093 = vsel %vm944, %v879, 0.0
        %v1094 = vsel %vm944, %v880, 0.0
        %v1095 = vadd.f32 %v1093, %v1094
        %v1096 = vsel %vm944, %v881, 0.0
        %v1097 = vadd.f32 %v1095, %v1096
        %v1098 = vsel %vm944, %v882, 0.0
        %v1099 = vadd.f32 %v1097, %v1098
        %v1100 = vsel %vm944, %v883, 0.0
        %v1101 = vadd.f32 %v1099, %v1100
        %v1102 = vsel %vm944, %v884, 0.0
        %v1103 = vadd.f32 %v1101, %v1102
        %v1104 = vsel %vm944, %v885, 0.0
        %v1105 = vadd.f32 %v1103, %v1104
        %v1106 = vsel %vm944, %v886, 0.0
        %v1107 = vadd.f32 %v1105, %v1106
        %v1108 = vsel %vm944, %v887, 0.0
        %v1109 = vadd.f32 %v1107, %v1108
        %v1110 = vsel %vm944, %v888, 0.0
        %v1111 = vadd.f32 %v1109, %v1110
        %v1112 = vsel %vm944, %v889, 0.0
        %v1113 = vadd.f32 %v1111, %v1112
        %v1114 = vsel %vm944, %v890, 0.0
        %v1115 = vadd.f32 %v1113, %v1114
        %v1116 = vsel %vm944, %v891, 0.0
        %v1117 = vadd.f32 %v1115, %v1116
        %v1118 = vsel %vm944, %v892, 0.0
        %v1119 = vadd.f32 %v1117, %v1118
        %v1120 = vsel %vm944, %v893, 0.0
        %v1121 = vadd.f32 %v1119, %v1120
        %v1122 = vsel %vm944, %v894, 0.0
        %v1123 = vadd.f32 %v1121, %v1122
        %v1124 = vrot.slane %v1123, 4
        %v1125 = vadd.f32 %v1123, %v1124
        %v1126 = vrot.slane %v1125, 2
        %v1127 = vadd.f32 %v1125, %v1126
        %v1128 = vrot.slane %v1127, 1
        %v1129 = vadd.f32 %v1127, %v1128
        %v1130 = vsel %vm944, %v895, 0.0
        %v1131 = vsel %vm944, %v896, 0.0
        %v1132 = vadd.f32 %v1130, %v1131
        %v1133 = vsel %vm944, %v897, 0.0
        %v1134 = vadd.f32 %v1132, %v1133
        %v1135 = vsel %vm944, %v898, 0.0
        %v1136 = vadd.f32 %v1134, %v1135
        %v1137 = vsel %vm944, %v899, 0.0
        %v1138 = vadd.f32 %v1136, %v1137
        %v1139 = vsel %vm944, %v900, 0.0
        %v1140 = vadd.f32 %v1138, %v1139
        %v1141 = vsel %vm944, %v901, 0.0
        %v1142 = vadd.f32 %v1140, %v1141
        %v1143 = vsel %vm944, %v902, 0.0
        %v1144 = vadd.f32 %v1142, %v1143
        %v1145 = vsel %vm944, %v903, 0.0
        %v1146 = vadd.f32 %v1144, %v1145
        %v1147 = vsel %vm944, %v904, 0.0
        %v1148 = vadd.f32 %v1146, %v1147
        %v1149 = vsel %vm944, %v905, 0.0
        %v1150 = vadd.f32 %v1148, %v1149
        %v1151 = vsel %vm944, %v906, 0.0
        %v1152 = vadd.f32 %v1150, %v1151
        %v1153 = vsel %vm944, %v907, 0.0
        %v1154 = vadd.f32 %v1152, %v1153
        %v1155 = vsel %vm944, %v908, 0.0
        %v1156 = vadd.f32 %v1154, %v1155
        %v1157 = vsel %vm944, %v909, 0.0
        %v1158 = vadd.f32 %v1156, %v1157
        %v1159 = vsel %vm944, %v910, 0.0
        %v1160 = vadd.f32 %v1158, %v1159
        %v1161 = vrot.slane %v1160, 4
        %v1162 = vadd.f32 %v1160, %v1161
        %v1163 = vrot.slane %v1162, 2
        %v1164 = vadd.f32 %v1162, %v1163
        %v1165 = vrot.slane %v1164, 1
        %v1166 = vadd.f32 %v1164, %v1165
        %v1167 = vsel %vm944, %v911, 0.0
        %v1168 = vsel %vm944, %v912, 0.0
        %v1169 = vadd.f32 %v1167, %v1168
        %v1170 = vsel %vm944, %v913, 0.0
        %v1171 = vadd.f32 %v1169, %v1170
        %v1172 = vsel %vm944, %v914, 0.0
        %v1173 = vadd.f32 %v1171, %v1172
        %v1174 = vsel %vm944, %v915, 0.0
        %v1175 = vadd.f32 %v1173, %v1174
        %v1176 = vsel %vm944, %v916, 0.0
        %v1177 = vadd.f32 %v1175, %v1176
        %v1178 = vsel %vm944, %v917, 0.0
        %v1179 = vadd.f32 %v1177, %v1178
        %v1180 = vsel %vm944, %v918, 0.0
        %v1181 = vadd.f32 %v1179, %v1180
        %v1182 = vsel %vm944, %v919, 0.0
        %v1183 = vadd.f32 %v1181, %v1182
        %v1184 = vsel %vm944, %v920, 0.0
        %v1185 = vadd.f32 %v1183, %v1184
        %v1186 = vsel %vm944, %v921, 0.0
        %v1187 = vadd.f32 %v1185, %v1186
        %v1188 = vsel %vm944, %v922, 0.0
        %v1189 = vadd.f32 %v1187, %v1188
        %v1190 = vsel %vm944, %v923, 0.0
        %v1191 = vadd.f32 %v1189, %v1190
        %v1192 = vsel %vm944, %v924, 0.0
        %v1193 = vadd.f32 %v1191, %v1192
        %v1194 = vsel %vm944, %v925, 0.0
        %v1195 = vadd.f32 %v1193, %v1194
        %v1196 = vsel %vm944, %v926, 0.0
        %v1197 = vadd.f32 %v1195, %v1196
        %v1198 = vrot.slane %v1197, 4
        %v1199 = vadd.f32 %v1197, %v1198
        %v1200 = vrot.slane %v1199, 2
        %v1201 = vadd.f32 %v1199, %v1200
        %v1202 = vrot.slane %v1201, 1
        %v1203 = vadd.f32 %v1201, %v1202
        %v1204 = vsel %vm944, %v927, 0.0
        %v1205 = vsel %vm944, %v928, 0.0
        %v1206 = vadd.f32 %v1204, %v1205
        %v1207 = vsel %vm944, %v929, 0.0
        %v1208 = vadd.f32 %v1206, %v1207
        %v1209 = vsel %vm944, %v930, 0.0
        %v1210 = vadd.f32 %v1208, %v1209
        %v1211 = vsel %vm944, %v931, 0.0
        %v1212 = vadd.f32 %v1210, %v1211
        %v1213 = vsel %vm944, %v932, 0.0
        %v1214 = vadd.f32 %v1212, %v1213
        %v1215 = vsel %vm944, %v933, 0.0
        %v1216 = vadd.f32 %v1214, %v1215
        %v1217 = vsel %vm944, %v934, 0.0
        %v1218 = vadd.f32 %v1216, %v1217
        %v1219 = vsel %vm944, %v935, 0.0
        %v1220 = vadd.f32 %v1218, %v1219
        %v1221 = vsel %vm944, %v936, 0.0
        %v1222 = vadd.f32 %v1220, %v1221
        %v1223 = vsel %vm944, %v937, 0.0
        %v1224 = vadd.f32 %v1222, %v1223
        %v1225 = vsel %vm944, %v938, 0.0
        %v1226 = vadd.f32 %v1224, %v1225
        %v1227 = vsel %vm944, %v939, 0.0
        %v1228 = vadd.f32 %v1226, %v1227
        %v1229 = vsel %vm944, %v940, 0.0
        %v1230 = vadd.f32 %v1228, %v1229
        %v1231 = vsel %vm944, %v941, 0.0
        %v1232 = vadd.f32 %v1230, %v1231
        %v1233 = vsel %vm944, %v942, 0.0
        %v1234 = vadd.f32 %v1232, %v1233
        %v1235 = vrot.slane %v1234, 4
        %v1236 = vadd.f32 %v1234, %v1235
        %v1237 = vrot.slane %v1236, 2
        %v1238 = vadd.f32 %v1236, %v1237
        %v1239 = vrot.slane %v1238, 1
        %v1240 = vadd.f32 %v1238, %v1239
        %vm1249 = vcmask 1041409
        %v1250 = vsel %vm1249, %v1018, %v981
        %vm1251 = vcmask 1042434
        %v1252 = vsel %vm1251, %v1055, %v1250
        %vm1253 = vcmask 1043459
        %v1254 = vsel %vm1253, %v1092, %v1252
        %vm1255 = vcmask 1044484
        %v1256 = vsel %vm1255, %v1129, %v1254
        %vm1257 = vcmask 1045509
        %v1258 = vsel %vm1257, %v1166, %v1256
        %vm1259 = vcmask 1046534
        %v1260 = vsel %vm1259, %v1203, %v1258
        %vm1261 = vcmask 1047559
        %v1262 = vsel %vm1261, %v1240, %v1260
        %v1264 = vadd.f32 %v943, %v1262
        %1265 = vst.msk [vmem:[#allocation2] sm:$0xff] %vm944, %v1264
        %p1266 = scmp.eq.s32.totalorder %s25, 1
        // Predicated region
        $region83: #{tpu_custom_call.1} parent=73 // pred_check
          %p1267 = pneg %p1266
        $region84: #{tpu_custom_call.1} parent=73 // pred_check_branch
          %1269 = sbr.rel (%p1267) target = $region86
        $region85: #{tpu_custom_call.1} parent=73 // pred_region
          %v1270 = vld [vmem:[#allocation2] sm:$0xff]
          %v1271 = vmul.f32 %v1270, 0.00390625
          %v1272 = vld [vmem:[%s1] sm:$0xf]
          %v1273 = vld [vmem:[%s2] sm:$0x1]
          %v1275 = vlaneseq
          %v1276 = vshrl.u32 %v1275, 7
          %v1277 = vsub.s32 0, %v1276
          %v1278 = vrot.slane %v1273, %v1277
          %v1281 = vsel %vm944, %v1271, 0
          %vm1283 = vcmask 1043456
          %v1285 = vsel %vm1283, %v1272, 0
          %1287 = vmatprep.subr.mxu0 0.0
          %1288 = vmatpush1.msra.mxu0 %v1285
          %1289 = vmatprep.subr.mxu0 0.0
          %1290 = vmatpush1.msra.mxu0 0.0
          %1291 = vmatprep.subr.mxu0 0.0
          %1292 = vmatpush1.msra.mxu0 0.0
          %1293 = vmatprep.subr.mxu0 0.0
          %1294 = vmatpush1.msra.mxu0 0.0
          %1295 = vmatprep.subr.mxu0 0.0
          %1296 = vmatpush1.msra.mxu0 0.0
          %1297 = vmatprep.subr.mxu0 0.0
          %1298 = vmatpush1.msra.mxu0 0.0
          %1299 = vmatprep.subr.mxu0 0.0
          %1300 = vmatpush1.msra.mxu0 0.0
          %1301 = vmatprep.subr.mxu0 0.0
          %1302 = vmatpush1.msra.mxu0 0.0
          %1303 = vmatprep.subr.mxu0 0.0
          %1304 = vmatpush1.msra.mxu0 0.0
          %1305 = vmatprep.subr.mxu0 0.0
          %1306 = vmatpush1.msra.mxu0 0.0
          %1307 = vmatprep.subr.mxu0 0.0
          %1308 = vmatpush1.msra.mxu0 0.0
          %1309 = vmatprep.subr.mxu0 0.0
          %1310 = vmatpush1.msra.mxu0 0.0
          %1311 = vmatprep.subr.mxu0 0.0
          %1312 = vmatpush1.msra.mxu0 0.0
          %1313 = vmatprep.subr.mxu0 0.0
          %1314 = vmatpush1.msra.mxu0 0.0
          %1315 = vmatprep.subr.mxu0 0.0
          %1316 = vmatpush1.msra.mxu0 0.0
          %1317 = vmatprep.subr.mxu0 0.0
          %1318 = vmatpush1.msra.mxu0 0.0
          %1319 = vmatprep.subr.mxu0 0.0
          %1320 = vmatpush1.msra.mxu0 0.0
          %1321 = vmatprep.subr.mxu0 0.0
          %1322 = vmatpush1.msra.mxu0 0.0
          %1323 = vmatprep.subr.mxu0 0.0
          %1324 = vmatpush1.msra.mxu0 0.0
          %1325 = vmatprep.subr.mxu0 0.0
          %1326 = vmatpush1.msra.mxu0 0.0
          %1327 = vmatprep.subr.mxu0 0.0
          %1328 = vmatpush1.msra.mxu0 0.0
          %1329 = vmatprep.subr.mxu0 0.0
          %1330 = vmatpush1.msra.mxu0 0.0
          %1331 = vmatprep.subr.mxu0 0.0
          %1332 = vmatpush1.msra.mxu0 0.0
          %1333 = vmatprep.subr.mxu0 0.0
          %1334 = vmatpush1.msra.mxu0 0.0
          %1335 = vmatprep.subr.mxu0 0.0
          %1336 = vmatpush1.msra.mxu0 0.0
          %1337 = vmatprep.subr.mxu0 0.0
          %1338 = vmatpush1.msra.mxu0 0.0
          %1339 = vmatprep.subr.mxu0 0.0
          %1340 = vmatpush1.msra.mxu0 0.0
          %1341 = vmatprep.subr.mxu0 0.0
          %1342 = vmatpush1.msra.mxu0 0.0
          %1343 = vmatprep.subr.mxu0 0.0
          %1344 = vmatpush1.msra.mxu0 0.0
          %1345 = vmatprep.subr.mxu0 0.0
          %1346 = vmatpush1.msra.mxu0 0.0
          %1347 = vmatprep.subr.mxu0 0.0
          %1348 = vmatpush1.msra.mxu0 0.0
          %1349 = vmatprep.subr.mxu0 0.0
          %1350 = vmatpush1.msra.mxu0 0.0
          %1351 = vmatprep.mubr.f32.mxu0 0.0
          %1352 = vmatmul.mubr.f32.gmra.mrb[0].mxu0 %v1281
          %v1353 = vpop.f32.mrb[0].mxu0
          %v1354 = vadd.f32 %v1278, %v1353
          %v1355 = vpop.f32.mrb[0].mxu0
          %1356 = vdwg.mxu0
          %v1357 = vmax.f32 %v1354, 0.0
          %1358 = vst [vmem:[#allocation4] sm:$0xff] %v1357
          %v1359 = vld [vmem:[%s3] sm:$0xff]
          %v1360 = vld [vmem:[%s3 + $0x8] sm:$0xff]
          %v1361 = vld [vmem:[%s3 + $0x10] sm:$0xff]
          %v1362 = vld [vmem:[%s3 + $0x18] sm:$0xff]
          %v1363 = vld [vmem:[%s3 + $0x20] sm:$0xff]
          %v1364 = vld [vmem:[%s3 + $0x28] sm:$0xff]
          %v1365 = vld [vmem:[%s3 + $0x30] sm:$0xff]
          %v1366 = vld [vmem:[%s3 + $0x38] sm:$0xff]
          %v1367 = vld [vmem:[%s3 + $0x40] sm:$0xff]
          %v1368 = vld [vmem:[%s3 + $0x48] sm:$0xff]
          %v1369 = vld [vmem:[%s3 + $0x50] sm:$0xff]
          %v1370 = vld [vmem:[%s3 + $0x58] sm:$0xff]
          %v1371 = vld [vmem:[%s3 + $0x60] sm:$0xff]
          %v1372 = vld [vmem:[%s3 + $0x68] sm:$0xff]
          %v1373 = vld [vmem:[%s3 + $0x70] sm:$0xff]
          %v1374 = vld [vmem:[%s3 + $0x78] sm:$0xff]
          %v1375 = vld [vmem:[%s4] sm:$0x1]
          %v1377 = vlaneseq
          %v1378 = vshrl.u32 %v1377, 7
          %v1379 = vsub.s32 0, %v1378
          %v1380 = vrot.slane %v1375, %v1379
          %1382 = vmatprep.subr.mxu0 0.0
          %1383 = vmatpush1.msra.mxu0 %v1359
          %1384 = vmatprep.subr.mxu0 0.0
          %1385 = vmatpush1.msra.mxu0 %v1360
          %1386 = vmatprep.subr.mxu0 0.0
          %1387 = vmatpush1.msra.mxu0 %v1361
          %1388 = vmatprep.subr.mxu0 0.0
          %1389 = vmatpush1.msra.mxu0 %v1362
          %1390 = vmatprep.subr.mxu0 0.0
          %1391 = vmatpush1.msra.mxu0 %v1363
          %1392 = vmatprep.subr.mxu0 0.0
          %1393 = vmatpush1.msra.mxu0 %v1364
          %1394 = vmatprep.subr.mxu0 0.0
          %1395 = vmatpush1.msra.mxu0 %v1365
          %1396 = vmatprep.subr.mxu0 0.0
          %1397 = vmatpush1.msra.mxu0 %v1366
          %1398 = vmatprep.subr.mxu0 0.0
          %1399 = vmatpush1.msra.mxu0 %v1367
          %1400 = vmatprep.subr.mxu0 0.0
          %1401 = vmatpush1.msra.mxu0 %v1368
          %1402 = vmatprep.subr.mxu0 0.0
          %1403 = vmatpush1.msra.mxu0 %v1369
          %1404 = vmatprep.subr.mxu0 0.0
          %1405 = vmatpush1.msra.mxu0 %v1370
          %1406 = vmatprep.subr.mxu0 0.0
          %1407 = vmatpush1.msra.mxu0 %v1371
          %1408 = vmatprep.subr.mxu0 0.0
          %1409 = vmatpush1.msra.mxu0 %v1372
          %1410 = vmatprep.subr.mxu0 0.0
          %1411 = vmatpush1.msra.mxu0 %v1373
          %1412 = vmatprep.subr.mxu0 0.0
          %1413 = vmatpush1.msra.mxu0 %v1374
          %1414 = vmatprep.subr.mxu0 0.0
          %1415 = vmatpush1.msra.mxu0 0.0
          %1416 = vmatprep.subr.mxu0 0.0
          %1417 = vmatpush1.msra.mxu0 0.0
          %1418 = vmatprep.subr.mxu0 0.0
          %1419 = vmatpush1.msra.mxu0 0.0
          %1420 = vmatprep.subr.mxu0 0.0
          %1421 = vmatpush1.msra.mxu0 0.0
          %1422 = vmatprep.subr.mxu0 0.0
          %1423 = vmatpush1.msra.mxu0 0.0
          %1424 = vmatprep.subr.mxu0 0.0
          %1425 = vmatpush1.msra.mxu0 0.0
          %1426 = vmatprep.subr.mxu0 0.0
          %1427 = vmatpush1.msra.mxu0 0.0
          %1428 = vmatprep.subr.mxu0 0.0
          %1429 = vmatpush1.msra.mxu0 0.0
          %1430 = vmatprep.subr.mxu0 0.0
          %1431 = vmatpush1.msra.mxu0 0.0
          %1432 = vmatprep.subr.mxu0 0.0
          %1433 = vmatpush1.msra.mxu0 0.0
          %1434 = vmatprep.subr.mxu0 0.0
          %1435 = vmatpush1.msra.mxu0 0.0
          %1436 = vmatprep.subr.mxu0 0.0
          %1437 = vmatpush1.msra.mxu0 0.0
          %1438 = vmatprep.subr.mxu0 0.0
          %1439 = vmatpush1.msra.mxu0 0.0
          %1440 = vmatprep.subr.mxu0 0.0
          %1441 = vmatpush1.msra.mxu0 0.0
          %1442 = vmatprep.subr.mxu0 0.0
          %1443 = vmatpush1.msra.mxu0 0.0
          %1444 = vmatprep.subr.mxu0 0.0
          %1445 = vmatpush1.msra.mxu0 0.0
          %1446 = vmatprep.mubr.f32.mxu0 0.0
          %1447 = vmatmul.mubr.f32.gmra.mrb[0].mxu0 %v1357
          %v1448 = vpop.f32.mrb[0].mxu0
          %v1449 = vadd.f32 %v1380, %v1448
          %v1450 = vpop.f32.mrb[0].mxu0
          %1451 = vdwg.mxu0
          %1452 = vst [vmem:[#allocation6] sm:$0xff] %v1449
        $region86: #{tpu_custom_call.1} parent=73 // pred_fallthru
          _
        // Predicated region
        $region87: #{tpu_custom_call.1} parent=73 // pred_check
          %p1453 = pneg %p162
        $region88: #{tpu_custom_call.1} parent=73 // pred_check_branch
          %1455 = sbr.rel (%p1453) target = $region90
        $region89: #{tpu_custom_call.1} parent=73 // pred_region
          %s1457 = ssub.s32 128, 128
          %1458 = vsyncadd [#allocation5], %s1457
          %s1459 = smul.addr %s24, 128
          %s1460 = scalar_lea.hbm %s5, %s1459
          %s1462 = sshll.u32 [#allocation4], 4
          %s1463 = int_to_ptr.vmem [resolvable:$true] %s1462
          %1465 = dma.vmem_to_hbm [thread:$0]  %s1463, 128, %s1460, [#allocation5]
        $region90: #{tpu_custom_call.1} parent=73 // pred_fallthru
          _
        // Predicated region
        $region91: #{tpu_custom_call.1} parent=73 // pred_check
          %p1466 = pneg %p188
        $region92: #{tpu_custom_call.1} parent=73 // pred_check_branch
          %1468 = sbr.rel (%p1466) target = $region94
        $region93: #{tpu_custom_call.1} parent=73 // pred_region
          %s1470 = ssub.s32 128, 128
          %1471 = vsyncadd [#allocation7], %s1470
          %s1472 = smul.addr %s24, 128
          %s1473 = scalar_lea.hbm %s6, %s1472
          %s1475 = sshll.u32 [#allocation6], 4
          %s1476 = int_to_ptr.vmem [resolvable:$true] %s1475
          %1478 = dma.vmem_to_hbm [thread:$0]  %s1476, 128, %s1473, [#allocation7]
        $region94: #{tpu_custom_call.1} parent=73 // pred_fallthru
          _
        // Predicated region
        $region95: #{tpu_custom_call.1} parent=73 // pred_check
          %p1479 = pneg %p162
        $region96: #{tpu_custom_call.1} parent=73 // pred_check_branch
          %1481 = sbr.rel (%p1479) target = $region98
        $region97: #{tpu_custom_call.1} parent=73 // pred_region
          %1482 = dma.done [#allocation5], 128
        $region98: #{tpu_custom_call.1} parent=73 // pred_fallthru
          _
        // Predicated region
        $region99: #{tpu_custom_call.1} parent=73 // pred_check
          %p1483 = pneg %p188
        $region100: #{tpu_custom_call.1} parent=73 // pred_check_branch
          %1485 = sbr.rel (%p1483) target = $region102
        $region101: #{tpu_custom_call.1} parent=73 // pred_region
          %1486 = dma.done [#allocation7], 128
        $region102: #{tpu_custom_call.1} parent=73 // pred_fallthru
          _
      $region74: #{tpu_custom_call.1} parent=5 // pred_fallthru
        _
      %p1487 = scmp.le.s32.totalorder 2, %s15
      // Predicated region
      $region103: #{tpu_custom_call.1} parent=5 // pred_check
        %p1488 = pneg %p1487
      $region104: #{tpu_custom_call.1} parent=5 // pred_check_branch
        %1490 = sbr.rel (%p1488) target = $region106
      $region105: #{tpu_custom_call.1} parent=5 // pred_region
        %s1491 = ssub.s32 %s15, 2
      $region106: #{tpu_custom_call.1} parent=5 // pred_fallthru
        _
    $region6: #{tpu_custom_call.1} parent=1 // loop_footer
      %s19 = sadd.s32 1, %s15
    $region7: #{tpu_custom_call.1} parent=1 // loop_footer_branch
      %14 = sbr.rel target = $region3
    $region8: #{tpu_custom_call.1} parent=1 // loop_exit
      _
    %1492 = vsyncpa [#allocation5], 1
    %s1493 = scalar_lea.sflag [#allocation5], 1
    %1494 = vsyncpa %s1493, 1
    %1495 = vsyncpa [#allocation7], 1

</llo_original>
